<compile_context>
chip_gen: v6e
topology: v6e:2x2x1
jax: 0.10.0
libtpu: 0.0.40
codegen_flags: <defaults>
</compile_context>

<pallas_src>
import functools

import jax
import jax.numpy as jnp
from jax.experimental import pallas as pl
from jax.experimental.pallas import tpu as pltpu


_LANES = 128
_SUBLANES = 8
# Per-input tile capped at 4 MiB: 3 inputs x 2 pipeline buffers ~= 24 MiB,
# comfortably inside v7x's 64 MiB physical VMEM (and trivially inside v5e/v6e).
_MAX_TILE_BYTES = 4 * 1024 * 1024
# Leading "parallel" grid axis: lets Mosaic shard the stream across both
# TensorCores on v7x; runs serially (no cost) on single-TC v5e/v6e.
_N_CORES = 2
# Below this many elements (larger of the two tensors) a pallas_call is pure
# launch overhead and XLA's fused reduction wins.
_MIN_PALLAS_ELEMS = 1 << 17
_VMEM_LIMIT_BYTES = 48 * 1024 * 1024


def _round_up(x: int, m: int) -> int:
    return ((x + m - 1) // m) * m


# ---------------------------------------------------------------------------
# Fused Pallas kernel: one grid step accumulates both sums-of-squares into an
# (8,128) f32 vector accumulator per term held in the revisited output block.
# ---------------------------------------------------------------------------
def _fused_energy_kernel(o_ref, t_ref, s_ref, out_ref, *,
                         inner, nblk_mse, nblk_l2, nblk_total):
    c = pl.program_id(0)           # TensorCore shard (parallel axis)
    j = pl.program_id(1)           # streaming/reduction axis (arbitrary)
    g = c * inner + j              # global block index

    @pl.when(j == 0)
    def _init():
        out_ref[...] = jnp.zeros_like(out_ref)

    def _acc_mse():
        d = (o_ref[...] - t_ref[...]).astype(jnp.float32)
        # (tile_rows,128) -> (tile_rows/8, 8, 128) is a free reshape; the sum
        # over axis 0 is pure VPU vreg adds (no cross-lane XLU work per step).
        out_ref[0, 0, :, :] += (d * d).reshape(-1, _SUBLANES, _LANES).sum(axis=0)

    def _acc_l2():
        s = s_ref[...].astype(jnp.float32)
        out_ref[0, 1, :, :] += (s * s).reshape(-1, _SUBLANES, _LANES).sum(axis=0)

    # nblk_* are static Python ints: only emit gates for inputs that do not
    # cover the whole grid (mismatched sizes / sub-tile placeholders).
    if nblk_mse >= nblk_total:
        _acc_mse()
    elif nblk_mse > 0:
        pl.when(g < nblk_mse)(_acc_mse)
    if nblk_l2 >= nblk_total:
        _acc_l2()
    elif nblk_l2 > 0:
        pl.when(g < nblk_l2)(_acc_l2)


def _prep(x, tile_rows, nblk, inner):
    """Full-tile prefix (zero-copy reshape when aligned), jnp tail, index_map."""
    flat = x.reshape(-1)
    n = flat.shape[0]
    if nblk == 0:
        # Smaller than one tile: whole tensor is reduced by the jnp tail; the
        # kernel streams a single zero tile whose block index never changes
        # (DMA'd once) and whose accumulation is compiled out.
        return jnp.zeros((tile_rows, _LANES), x.dtype), flat, (lambda c, j: (0, 0))
    prefix = nblk * tile_rows * _LANES
    if prefix == n:
        head, tail = flat.reshape(nblk * tile_rows, _LANES), None   # zero-copy
    else:
        # Sub-tile / sub-lane remainder handled by a tiny jnp reduction outside.
        head = flat[:prefix].reshape(nblk * tile_rows, _LANES)
        tail = flat[prefix:]
    if nblk >= _N_CORES * inner:
        idx = lambda c, j: (c * inner + j, 0)
    else:
        last = nblk - 1
        # Clamp: once past this input's blocks the block index stops changing,
        # so Pallas skips the re-DMA; compute is gated in-kernel with pl.when.
        idx = lambda c, j: (jnp.minimum(c * inner + j, last), 0)
    return head, tail, idx


def _fused_energy_pallas(output, target, state, coeff):
    assert output.size == target.size, "MSE requires matching output/target sizes"
    n_mse = output.size
    n_l2 = state.size

    itemsize = max(output.dtype.itemsize, target.dtype.itemsize, state.dtype.itemsize)
    max_tile_rows = _MAX_TILE_BYTES // (_LANES * itemsize)

    rows_mse = n_mse // _LANES
    rows_l2 = n_l2 // _LANES
    max_rows = max(rows_mse, rows_l2, 32)
    # Rounding to 32 sublanes satisfies the min-tile constraint for f32 (8),
    # bf16 (16) and int8/fp8 (32) alike.
    tile_rows = min(max_tile_rows, _round_up(pl.cdiv(max_rows, _N_CORES), 32))
    tile_elems = tile_rows * _LANES

    nblk_mse = n_mse // tile_elems
    nblk_l2 = n_l2 // tile_elems
    inner = pl.cdiv(max(nblk_mse, nblk_l2, 1), _N_CORES)
    nblk_total = _N_CORES * inner

    o_head, o_tail, mse_idx = _prep(output, tile_rows, nblk_mse, inner)
    t_head, t_tail, _ = _prep(target, tile_rows, nblk_mse, inner)
    s_head, s_tail, l2_idx = _prep(state, tile_rows, nblk_l2, inner)

    kernel = functools.partial(
        _fused_energy_kernel,
        inner=inner, nblk_mse=nblk_mse, nblk_l2=nblk_l2, nblk_total=nblk_total)

    in_bytes = (o_head.size * o_head.dtype.itemsize
                + t_head.size * t_head.dtype.itemsize
                + s_head.size * s_head.dtype.itemsize)

    partials = pl.pallas_call(
        kernel,
        out_shape=jax.ShapeDtypeStruct((_N_CORES, 2, _SUBLANES, _LANES), jnp.float32),
        grid=(_N_CORES, inner),
        in_specs=[
            pl.BlockSpec((tile_rows, _LANES), mse_idx),
            pl.BlockSpec((tile_rows, _LANES), mse_idx),
            pl.BlockSpec((tile_rows, _LANES), l2_idx),
        ],
        out_specs=pl.BlockSpec((1, 2, _SUBLANES, _LANES), lambda c, j: (c, 0, 0, 0)),
        compiler_params=pltpu.CompilerParams(
            dimension_semantics=("parallel", "arbitrary"),
            vmem_limit_bytes=_VMEM_LIMIT_BYTES,
        ),
        cost_estimate=pl.CostEstimate(
            flops=3 * n_mse + 2 * n_l2,
            transcendentals=0,
            bytes_accessed=in_bytes,
        ),
    )(o_head, t_head, s_head)

    # Final cross-lane reduce + cheap scalar finalize happen once, outside.
    mse_sum = jnp.sum(partials[:, 0])
    l2_sum = jnp.sum(partials[:, 1])

    if o_tail is not None:
        d = o_tail.astype(jnp.float32) - t_tail.astype(jnp.float32)
        mse_sum = mse_sum + jnp.sum(d * d)
    if s_tail is not None:
        sf = s_tail.astype(jnp.float32)
        l2_sum = l2_sum + jnp.sum(sf * sf)

    return (0.5 / n_mse) * mse_sum + jnp.float32(coeff) * l2_sum


def _fused_energy_jnp(output, target, state, coeff):
    d = output.astype(jnp.float32) - target.astype(jnp.float32)
    s = state.astype(jnp.float32)
    return 0.5 * jnp.mean(d * d) + jnp.float32(coeff) * jnp.sum(s * s)


def fused_energy_sum(output, target, state, coeff,
                     *, min_pallas_elems=_MIN_PALLAS_ELEMS):
    """MSE(output,target) + coeff*||state||^2, fused into one Pallas reduction."""
    if max(output.size, state.size) < min_pallas_elems:
        # Tiny inputs: pure launch overhead — XLA's fused reduction wins.
        return _fused_energy_jnp(output, target, state, coeff)
    return _fused_energy_pallas(output, target, state, coeff)


# ---------------------------------------------------------------------------
# Module-like wrappers mirroring the PyTorch class structure.
# ---------------------------------------------------------------------------
class EnergyFunction:
    def __add__(self, other):
        return EnergySum([self, other])

    def __call__(self, output, target, meta_model, state):
        raise NotImplementedError


class MSEEnergy(EnergyFunction):
    def __call__(self, output, target, meta_model, state):
        # TODO(synk): meta_model carries no tensor semantics for these energies
        # (unused); nothing to lower for it.
        d = output.astype(jnp.float32) - target.astype(jnp.float32)
        return 0.5 * jnp.mean(d * d)


class StateL2Energy(EnergyFunction):
    def __init__(self, coeff=0.01):
        self.coeff = float(coeff)

    def __call__(self, output, target, meta_model, state):
        s = state.astype(jnp.float32)
        return jnp.float32(self.coeff) * jnp.sum(s * s)


class EnergySum(EnergyFunction):
    """JAX/Pallas port of metaopt_spiking EnergySum."""

    def __init__(self, energy_list):
        self.energy_modules = list(energy_list)

    def __call__(self, output, target, meta_model, state):
        mods = self.energy_modules
        # Fused fast path: the canonical MSE + state-L2 pair collapses into a
        # single tiled Pallas reduction (one launch / one DMA schedule).
        if (len(mods) == 2
                and any(isinstance(m, MSEEnergy) for m in mods)
                and any(isinstance(m, StateL2Energy) for m in mods)):
            coeff = next(m.coeff for m in mods if isinstance(m, StateL2Energy))
            return fused_energy_sum(output, target, state, coeff)
        # Generic path: plain sum over modules (matches the PyTorch loop).
        loss = jnp.float32(0.0)
        for module in mods:
            loss = loss + module(output, target, meta_model, state)
        return loss


# ---------------------------------------------------------------------------
# Pure-JAX reference for correctness checks.
# ---------------------------------------------------------------------------
def _reference(output, target, state, coeff):
    o = output.astype(jnp.float32)
    t = target.astype(jnp.float32)
    s = state.astype(jnp.float32)
    return 0.5 * jnp.mean((o - t) ** 2) + coeff * jnp.sum(s * s)


if __name__ == "__main__":
    key = jax.random.PRNGKey(0)
    ks = jax.random.split(key, 12)

    energy = EnergySum([MSEEnergy(), StateL2Energy(coeff=0.01)])

    # 1) Module-native tiny shapes (batch=2, hidden=32): pure-jnp fast path.
    out_s = jax.random.normal(ks[0], (2, 32), dtype=jnp.float32)
    tgt_s = jax.random.normal(ks[1], (2, 32), dtype=jnp.float32)
    st_s = jax.random.normal(ks[2], (2, 32), dtype=jnp.float32)
    loss_s = jax.block_until_ready(energy(out_s, tgt_s, None, st_s))
    ref_s = _reference(out_s, tgt_s, st_s, 0.01)
    assert jnp.allclose(loss_s, ref_s, rtol=1e-5, atol=1e-6), (loss_s, ref_s)

    # 2) Equal-size case exercising the fused Pallas kernel with a zero-copy
    #    reshape (2 full tiles -> one per TensorCore on v7x).
    out_l = jax.random.normal(ks[3], (1024, 256), dtype=jnp.float32)
    tgt_l = jax.random.normal(ks[4], (1024, 256), dtype=jnp.float32)
    st_l = jax.random.normal(ks[5], (1024, 256), dtype=jnp.float32)
    loss_l = jax.block_until_ready(energy(out_l, tgt_l, None, st_l))
    ref_l = _reference(out_l, tgt_l, st_l, 0.01)
    assert jnp.allclose(loss_l, ref_l, rtol=1e-4, atol=1e-2), (loss_l, ref_l)

    # 3) Mismatched, non-tile-aligned sizes: exercises per-input block counts,
    #    clamped index_maps, pl.when gating and the jnp tail reductions.
    out_m = jax.random.normal(ks[6], (700, 300), dtype=jnp.float32)
    tgt_m = jax.random.normal(ks[7], (700, 300), dtype=jnp.float32)
    st_m = jax.random.normal(ks[8], (512, 256), dtype=jnp.float32)
    loss_m = jax.block_until_ready(energy(out_m, tgt_m, None, st_m))
    ref_m = _reference(out_m, tgt_m, st_m, 0.01)
    assert jnp.allclose(loss_m, ref_m, rtol=1e-4, atol=1e-2), (loss_m, ref_m)

    # 4) Large output with a sub-tile state: exercises the zero-block
    #    placeholder path (state handled entirely by the jnp tail).
    out_b = jax.random.normal(ks[9], (2048, 256), dtype=jnp.float32)
    tgt_b = jax.random.normal(ks[10], (2048, 256), dtype=jnp.float32)
    st_b = jax.random.normal(ks[11], (16, 128), dtype=jnp.float32)
    loss_b = jax.block_until_ready(energy(out_b, tgt_b, None, st_b))
    ref_b = _reference(out_b, tgt_b, st_b, 0.01)
    assert jnp.allclose(loss_b, ref_b, rtol=1e-4, atol=1e-2), (loss_b, ref_b)

    print("KERNEL_OK")
</pallas_src>

<mosaic_0001>
module attributes {stable_mosaic.version = 11 : i64} {
  func.func @_fused_energy_kernel(%arg0: i32, %arg1: i32, %arg2: memref<1024x128xf32, #tpu.memory_space<vmem>>, %arg3: memref<1024x128xf32, #tpu.memory_space<vmem>>, %arg4: memref<1024x128xf32, #tpu.memory_space<vmem>>, %arg5: memref<1x2x8x128xf32, #tpu.memory_space<vmem>>) attributes {dimension_semantics = [#tpu.dimension_semantics<parallel>, #tpu.dimension_semantics<arbitrary>], iteration_bounds = array<i64: 2, 1>, scalar_prefetch = 0 : i64, scratch_operands = 0 : i64, tpu.core_type = #tpu.core_type<tc>, window_params = [{transform_indices = @transform_0, window_bounds = array<i64: 1024, 128>}, {transform_indices = @transform_1, window_bounds = array<i64: 1024, 128>}, {transform_indices = @transform_2, window_bounds = array<i64: 1024, 128>}, {transform_indices = @transform_3, window_bounds = array<i64: 1, 2, 8, 128>}]} {
    %c0_i32 = arith.constant 0 : i32
    %0 = arith.cmpi eq, %arg1, %c0_i32 : i32
    %1 = arith.extui %0 : i1 to i32
    %c0_i32_0 = arith.constant 0 : i32
    %2 = arith.cmpi ne, %1, %c0_i32_0 : i32
    scf.if %2 {
      %cst_22 = arith.constant 0.000000e+00 : f32
      %25 = vector.broadcast %cst_22 : f32 to vector<1x2x8x128xf32>
      %c0_23 = arith.constant 0 : index
      %c0_24 = arith.constant 0 : index
      %c0_25 = arith.constant 0 : index
      %c0_26 = arith.constant 0 : index
      %26 = vector.load %arg5[%c0_23, %c0_24, %c0_25, %c0_26] : memref<1x2x8x128xf32, #tpu.memory_space<vmem>>, vector<1x2x8x128xf32>
      tpu.vector_store %arg5[%c0_23, %c0_24, %c0_25, %c0_26], %25 {strides = array<i32>} : memref<1x2x8x128xf32, #tpu.memory_space<vmem>>, vector<1x2x8x128xf32>,
    } else {
    }
    %c0 = arith.constant 0 : index
    %c0_1 = arith.constant 0 : index
    %3 = vector.load %arg2[%c0, %c0_1] : memref<1024x128xf32, #tpu.memory_space<vmem>>, vector<1024x128xf32>
    %c0_2 = arith.constant 0 : index
    %c0_3 = arith.constant 0 : index
    %4 = vector.load %arg3[%c0_2, %c0_3] : memref<1024x128xf32, #tpu.memory_space<vmem>>, vector<1024x128xf32>
    %5 = arith.subf %3, %4 : vector<1024x128xf32>
    %c0_4 = arith.constant 0 : index
    %c0_5 = arith.constant 0 : index
    %c0_6 = arith.constant 0 : index
    %c0_7 = arith.constant 0 : index
    %6 = vector.load %arg5[%c0_4, %c0_5, %c0_6, %c0_7] : memref<1x2x8x128xf32, #tpu.memory_space<vmem>>, vector<1x1x8x128xf32>
    %7 = vector.shape_cast %6 : vector<1x1x8x128xf32> to vector<8x128xf32>
    %8 = arith.mulf %5, %5 : vector<1024x128xf32>
    %9 = vector.shape_cast %8 : vector<1024x128xf32> to vector<128x8x128xf32>
    %cst = arith.constant dense<0.000000e+00> : vector<8x128xf32>
    %10 = vector.multi_reduction <add>, %9, %cst [0] : vector<128x8x128xf32> to vector<8x128xf32>
    %11 = arith.addf %7, %10 : vector<8x128xf32>
    %c0_8 = arith.constant 0 : index
    %c0_9 = arith.constant 0 : index
    %c0_10 = arith.constant 0 : index
    %c0_11 = arith.constant 0 : index
    %12 = vector.load %arg5[%c0_8, %c0_9, %c0_10, %c0_11] : memref<1x2x8x128xf32, #tpu.memory_space<vmem>>, vector<1x1x8x128xf32>
    %13 = vector.shape_cast %12 : vector<1x1x8x128xf32> to vector<8x128xf32>
    %14 = vector.shape_cast %11 : vector<8x128xf32> to vector<1x1x8x128xf32>
    tpu.vector_store %arg5[%c0_8, %c0_9, %c0_10, %c0_11], %14 {strides = array<i32>} : memref<1x2x8x128xf32, #tpu.memory_space<vmem>>, vector<1x1x8x128xf32>,
    %c0_12 = arith.constant 0 : index
    %c0_13 = arith.constant 0 : index
    %15 = vector.load %arg4[%c0_12, %c0_13] : memref<1024x128xf32, #tpu.memory_space<vmem>>, vector<1024x128xf32>
    %c0_14 = arith.constant 0 : index
    %c1 = arith.constant 1 : index
    %c0_15 = arith.constant 0 : index
    %c0_16 = arith.constant 0 : index
    %16 = vector.load %arg5[%c0_14, %c1, %c0_15, %c0_16] : memref<1x2x8x128xf32, #tpu.memory_space<vmem>>, vector<1x1x8x128xf32>
    %17 = vector.shape_cast %16 : vector<1x1x8x128xf32> to vector<8x128xf32>
    %18 = arith.mulf %15, %15 : vector<1024x128xf32>
    %19 = vector.shape_cast %18 : vector<1024x128xf32> to vector<128x8x128xf32>
    %cst_17 = arith.constant dense<0.000000e+00> : vector<8x128xf32>
    %20 = vector.multi_reduction <add>, %19, %cst_17 [0] : vector<128x8x128xf32> to vector<8x128xf32>
    %21 = arith.addf %17, %20 : vector<8x128xf32>
    %c0_18 = arith.constant 0 : index
    %c1_19 = arith.constant 1 : index
    %c0_20 = arith.constant 0 : index
    %c0_21 = arith.constant 0 : index
    %22 = vector.load %arg5[%c0_18, %c1_19, %c0_20, %c0_21] : memref<1x2x8x128xf32, #tpu.memory_space<vmem>>, vector<1x1x8x128xf32>
    %23 = vector.shape_cast %22 : vector<1x1x8x128xf32> to vector<8x128xf32>
    %24 = vector.shape_cast %21 : vector<8x128xf32> to vector<1x1x8x128xf32>
    tpu.vector_store %arg5[%c0_18, %c1_19, %c0_20, %c0_21], %24 {strides = array<i32>} : memref<1x2x8x128xf32, #tpu.memory_space<vmem>>, vector<1x1x8x128xf32>,
    return
  }
  func.func @transform_0(%arg0: i32, %arg1: i32) -> (i32, i32) {
    %c1_i32 = arith.constant 1 : i32
    %0 = arith.muli %arg0, %c1_i32 : i32
    %1 = arith.addi %0, %arg1 : i32
    %c0_i32 = arith.constant 0 : i32
    %c0_i32_0 = arith.constant 0 : i32
    return %1, %c0_i32 : i32, i32
  }
  func.func @transform_1(%arg0: i32, %arg1: i32) -> (i32, i32) {
    %c1_i32 = arith.constant 1 : i32
    %0 = arith.muli %arg0, %c1_i32 : i32
    %1 = arith.addi %0, %arg1 : i32
    %c0_i32 = arith.constant 0 : i32
    %c0_i32_0 = arith.constant 0 : i32
    return %1, %c0_i32 : i32, i32
  }
  func.func @transform_2(%arg0: i32, %arg1: i32) -> (i32, i32) {
    %c1_i32 = arith.constant 1 : i32
    %0 = arith.muli %arg0, %c1_i32 : i32
    %1 = arith.addi %0, %arg1 : i32
    %c0_i32 = arith.constant 0 : i32
    %c0_i32_0 = arith.constant 0 : i32
    return %1, %c0_i32 : i32, i32
  }
  func.func @transform_3(%arg0: i32, %arg1: i32) -> (i32, i32, i32, i32) {
    %c0_i32 = arith.constant 0 : i32
    %c0_i32_0 = arith.constant 0 : i32
    %c0_i32_1 = arith.constant 0 : i32
    %c0_i32_2 = arith.constant 0 : i32
    return %arg0, %c0_i32, %c0_i32_0, %c0_i32_1 : i32, i32, i32, i32
  }
}

</mosaic_0001>

<llo_original>
// kernel: tpu_custom_call.1
$region0: #{tpu_custom_call.1}
  #allocation0 [shape = 'u32[]', space=smem, size = 0x4, offset = 0x4, fixed_abs, tag = 'smem constant byte address 0x4 - core index']
  #allocation1 [shape = 'u32[144,128]{1,0:T(1,128)}', space=vmem, size = 0x12000, scoped, tag = 'internal scratch']
  %s0 = inlined_call_operand.hbm [shape: f32[2048,128], index: 0, kind: input, shape index: {}]
  %s1 = inlined_call_operand.hbm [shape: f32[2048,128], index: 1, kind: input, shape index: {}]
  %s2 = inlined_call_operand.hbm [shape: f32[2048,128], index: 2, kind: input, shape index: {}]
  %s3 = inlined_call_operand.hbm [shape: f32[2,2,8,128], index: 3, kind: output, shape index: {}]
  %s4 = sld [smem:[#allocation0]]
  $region61: #{tpu_custom_call.1} parent=0
    _
  %s6 = ssub.s32 1, %s4
  %s7 = scalar_select 0, %s6, %s4
  $region1: #{tpu_custom_call.1} parent=0
    #allocation2 [shape = 'u8[1048576]{0}', space=vmem, size = 0x100000, scoped, tag = 'input window, operand 0']
    #allocation3 [shape = 's32[2]{0}', space=sflag, size = 0x8, scoped, tag = 'scoped memory for tpu_custom_call.1']
    #allocation4 [shape = 's32[2]{0}', space=sflag, size = 0x8, scoped, tag = 'scoped memory for tpu_custom_call.1']
    #allocation5 [shape = 'u8[1048576]{0}', space=vmem, size = 0x100000, scoped, tag = 'input window, operand 1']
    #allocation6 [shape = 's32[2]{0}', space=sflag, size = 0x8, scoped, tag = 'scoped memory for tpu_custom_call.1']
    #allocation7 [shape = 'u8[1048576]{0}', space=vmem, size = 0x100000, scoped, tag = 'input window, operand 2']
    #allocation8 [shape = 'u8[16384]{0}', space=vmem, size = 0x4000, scoped, tag = 'output window, operand 0']
    %8 = vsyncpa [#allocation3], 0
    %s9 = scalar_lea.sflag [#allocation3], 1
    %10 = vsyncpa %s9, 0
    %11 = vsyncpa [#allocation6], 0
    %s12 = scalar_lea.sflag [#allocation6], 1
    %13 = vsyncpa %s12, 0
    %14 = vsyncpa [#allocation4], 0
    %s15 = scalar_lea.sflag [#allocation4], 1
    %16 = vsyncpa %s15, 0
    loop: start=0, step=1, limit=4
    $region2: #{tpu_custom_call.1} parent=1 // loop_pre_header
      _
    $region3: #{tpu_custom_call.1} parent=1 // loop_header
      %s18 = sphi 0, %s22
      %p19 = scmp.ge.s32.totalorder %s18, 4
      %s25 = sphi 0, %s37
      %s26 = sphi 0, %s33
      %s27 = sphi 0, %s25
      %s28 = sphi 0, %s26
      %s29 = sphi 0, %s27
      %s30 = sphi 0, %s28
      %s42 = sphi 0, %s44
      %s45 = sphi 0, %s42
      %s46 = sphi 0, %s45
      %s62 = sphi 0, %s46
      %s70 = sphi 0, %s72
      %s73 = sphi 0, %s70
      %s74 = sphi 0, %s73
      %s90 = sphi 0, %s74
      %s98 = sphi 0, %s100
      %s101 = sphi 0, %s98
      %s102 = sphi 0, %s101
      %s118 = sphi 0, %s102
      %s124 = sphi 0, %s126
      %s127 = sphi 0, %s124
      %s128 = sphi 0, %s127
      %s144 = sphi 0, %s128
    $region4: #{tpu_custom_call.1} parent=1 // loop_header_branch
      %21 = sbr.rel (%p19) target = $region8
    $region5: #{tpu_custom_call.1} parent=1 // loop_body
      %s23 = ssub.s32 %s18, 1
      %s24 = ssub.s32 %s18, 2
      %s31 = sadd.s32 1, %s26
      %p32 = scmp.ge.s32.totalorder %s31, 1
      %s33 = scalar_select %p32, 0, %s31
      %s34 = sadd.s32 1, %s25
      %s35 = scalar_select %p32, %s34, %s25
      %p36 = scmp.ge.s32.totalorder %s35, 2
      %s37 = scalar_select %p36, 0, %s35
      %s38 = sadd.s32 %s25, %s26
      %s39 = sadd.s32 %s37, %s33
      %s40 = ssub.s32 %s38, %s39
      %p41 = scmp.eq.s32.totalorder %s40, 0
      %s43 = sadd.s32 %s42, 1
      %s44 = scalar_select %p41, %s42, %s43
      %p47 = pneg %p41
      %p48 = scmp.eq.s32.totalorder %s18, 1
      %p49 = por %p47, %p48
      %p50 = scmp.ne.s32.totalorder %s42, %s45
      %p51 = scmp.eq.s32.totalorder %s18, 0
      %p52 = por %p50, %p51
      %p53 = scmp.ne.s32.totalorder %s42, %s45
      %p54 = scmp.eq.s32.totalorder %s23, 1
      %p55 = por %p53, %p54
      %p56 = scmp.ne.s32.totalorder %s45, %s46
      %p57 = scmp.eq.s32.totalorder %s23, 0
      %p58 = por %p56, %p57
      %p59 = scmp.ne.s32.totalorder %s45, %s46
      %p60 = scmp.eq.s32.totalorder %s24, 1
      %p61 = por %p59, %p60
      %p63 = scmp.ne.s32.totalorder %s46, %s62
      %p64 = scmp.eq.s32.totalorder %s24, 0
      %p65 = por %p63, %p64
      %s66 = sadd.s32 %s25, %s26
      %s67 = sadd.s32 %s37, %s33
      %s68 = ssub.s32 %s66, %s67
      %p69 = scmp.eq.s32.totalorder %s68, 0
      %s71 = sadd.s32 %s70, 1
      %s72 = scalar_select %p69, %s70, %s71
      %p75 = pneg %p69
      %p76 = scmp.eq.s32.totalorder %s18, 1
      %p77 = por %p75, %p76
      %p78 = scmp.ne.s32.totalorder %s70, %s73
      %p79 = scmp.eq.s32.totalorder %s18, 0
      %p80 = por %p78, %p79
      %p81 = scmp.ne.s32.totalorder %s70, %s73
      %p82 = scmp.eq.s32.totalorder %s23, 1
      %p83 = por %p81, %p82
      %p84 = scmp.ne.s32.totalorder %s73, %s74
      %p85 = scmp.eq.s32.totalorder %s23, 0
      %p86 = por %p84, %p85
      %p87 = scmp.ne.s32.totalorder %s73, %s74
      %p88 = scmp.eq.s32.totalorder %s24, 1
      %p89 = por %p87, %p88
      %p91 = scmp.ne.s32.totalorder %s74, %s90
      %p92 = scmp.eq.s32.totalorder %s24, 0
      %p93 = por %p91, %p92
      %s94 = sadd.s32 %s25, %s26
      %s95 = sadd.s32 %s37, %s33
      %s96 = ssub.s32 %s94, %s95
      %p97 = scmp.eq.s32.totalorder %s96, 0
      %s99 = sadd.s32 %s98, 1
      %s100 = scalar_select %p97, %s98, %s99
      %p103 = pneg %p97
      %p104 = scmp.eq.s32.totalorder %s18, 1
      %p105 = por %p103, %p104
      %p106 = scmp.ne.s32.totalorder %s98, %s101
      %p107 = scmp.eq.s32.totalorder %s18, 0
      %p108 = por %p106, %p107
      %p109 = scmp.ne.s32.totalorder %s98, %s101
      %p110 = scmp.eq.s32.totalorder %s23, 1
      %p111 = por %p109, %p110
      %p112 = scmp.ne.s32.totalorder %s101, %s102
      %p113 = scmp.eq.s32.totalorder %s23, 0
      %p114 = por %p112, %p113
      %p115 = scmp.ne.s32.totalorder %s101, %s102
      %p116 = scmp.eq.s32.totalorder %s24, 1
      %p117 = por %p115, %p116
      %p119 = scmp.ne.s32.totalorder %s102, %s118
      %p120 = scmp.eq.s32.totalorder %s24, 0
      %p121 = por %p119, %p120
      %s122 = ssub.s32 %s25, %s37
      %p123 = scmp.eq.s32.totalorder %s122, 0
      %s125 = sadd.s32 %s124, 1
      %s126 = scalar_select %p123, %s124, %s125
      %p129 = pneg %p123
      %p130 = scmp.eq.s32.totalorder %s18, 1
      %p131 = por %p129, %p130
      %p132 = scmp.ne.s32.totalorder %s124, %s127
      %p133 = scmp.eq.s32.totalorder %s18, 0
      %p134 = por %p132, %p133
      %p135 = scmp.ne.s32.totalorder %s124, %s127
      %p136 = scmp.eq.s32.totalorder %s23, 1
      %p137 = por %p135, %p136
      %p138 = scmp.ne.s32.totalorder %s127, %s128
      %p139 = scmp.eq.s32.totalorder %s23, 0
      %p140 = por %p138, %p139
      %p141 = scmp.ne.s32.totalorder %s127, %s128
      %p142 = scmp.eq.s32.totalorder %s24, 1
      %p143 = por %p141, %p142
      %p145 = scmp.ne.s32.totalorder %s128, %s144
      %p146 = scmp.eq.s32.totalorder %s24, 0
      %p147 = por %p145, %p146
      %p148 = scmp.le.s32.totalorder 1, %s18
      %p149 = scmp.lt.s32.totalorder %s18, 3
      %p150 = pnand %p148, %p149
      %p151 = pneg %p150
      // Predicated region
      $region9: #{tpu_custom_call.1} parent=5 // pred_check
        _
      $region10: #{tpu_custom_call.1} parent=5 // pred_check_branch
        %153 = sbr.rel (%p150) target = $region12
      $region11: #{tpu_custom_call.1} parent=5 // pred_region
        %s154 = ssub.s32 %s18, 1
      $region12: #{tpu_custom_call.1} parent=5 // pred_fallthru
        _
      %p155 = scmp.lt.s32.totalorder %s18, 2
      // Predicated region
      $region13: #{tpu_custom_call.1} parent=5 // pred_check
        %p156 = pneg %p155
      $region14: #{tpu_custom_call.1} parent=5 // pred_check_branch
        %158 = sbr.rel (%p156) target = $region16
      $region15: #{tpu_custom_call.1} parent=5 // pred_region
        // Predicated region
        $region17: #{tpu_custom_call.1} parent=15 // pred_check
          %p159 = pneg %p52
        $region18: #{tpu_custom_call.1} parent=15 // pred_check_branch
          %161 = sbr.rel (%p159) target = $region20
        $region19: #{tpu_custom_call.1} parent=15 // pred_region
          %s162 = sand.u32 %s42, 1
          %s163 = scalar_lea.sflag [#allocation3], %s162
          %s164 = sand.u32 %s42, 1
          %s165 = smul.addr %s164, 1024
          %s166 = scalar_lea.vmem [#allocation2], %s165
          %s167 = sadd.s32 %s25, %s26
          %s168 = smul.u32 128, %s167
          %s170 = ssub.s32 16384, 16384
          %171 = vsyncadd %s163, %s170
          %s172 = smul.addr %s168, 128
          %s173 = scalar_lea.hbm %s0, %s172
          %s174 = sshll.u32 %s166, 4
          %s175 = int_to_ptr.vmem [resolvable:$true] %s174
          %180 = dma.hbm_to_vmem [thread:$0]  %s173, 16384, %s175, %s163, 128, 128, 8
        $region20: #{tpu_custom_call.1} parent=15 // pred_fallthru
          _
        // Predicated region
        $region21: #{tpu_custom_call.1} parent=15 // pred_check
          %p181 = pneg %p80
        $region22: #{tpu_custom_call.1} parent=15 // pred_check_branch
          %183 = sbr.rel (%p181) target = $region24
        $region23: #{tpu_custom_call.1} parent=15 // pred_region
          %s184 = sand.u32 %s18, 1
          %s185 = scalar_lea.sflag [#allocation6], %s184
          %s186 = sand.u32 %s70, 1
          %s187 = smul.addr %s186, 1024
          %s188 = scalar_lea.vmem [#allocation5], %s187
          %s189 = sadd.s32 %s25, %s26
          %s190 = smul.u32 128, %s189
          %s192 = ssub.s32 16384, 16384
          %193 = vsyncadd %s185, %s192
          %s194 = smul.addr %s190, 128
          %s195 = scalar_lea.hbm %s1, %s194
          %s196 = sshll.u32 %s188, 4
          %s197 = int_to_ptr.vmem [resolvable:$true] %s196
          %202 = dma.hbm_to_vmem [thread:$0]  %s195, 16384, %s197, %s185, 128, 128, 8
        $region24: #{tpu_custom_call.1} parent=15 // pred_fallthru
          _
        // Predicated region
        $region25: #{tpu_custom_call.1} parent=15 // pred_check
          %p203 = pneg %p108
        $region26: #{tpu_custom_call.1} parent=15 // pred_check_branch
          %205 = sbr.rel (%p203) target = $region28
        $region27: #{tpu_custom_call.1} parent=15 // pred_region
          %s206 = sand.u32 %s18, 1
          %s207 = scalar_lea.sflag [#allocation6], %s206
          %s208 = sand.u32 %s98, 1
          %s209 = smul.addr %s208, 1024
          %s210 = scalar_lea.vmem [#allocation7], %s209
          %s211 = sadd.s32 %s25, %s26
          %s212 = smul.u32 128, %s211
          %s214 = ssub.s32 16384, 16384
          %215 = vsyncadd %s207, %s214
          %s216 = smul.addr %s212, 128
          %s217 = scalar_lea.hbm %s2, %s216
          %s218 = sshll.u32 %s210, 4
          %s219 = int_to_ptr.vmem [resolvable:$true] %s218
          %224 = dma.hbm_to_vmem [thread:$0]  %s217, 16384, %s219, %s207, 128, 128, 8
        $region28: #{tpu_custom_call.1} parent=15 // pred_fallthru
          _
      $region16: #{tpu_custom_call.1} parent=5 // pred_fallthru
        _
      %p225 = scmp.le.s32.totalorder 1, %s18
      %p226 = scmp.lt.s32.totalorder %s18, 3
      %p227 = pnand %p225, %p226
      %p228 = pneg %p227
      // Predicated region
      $region29: #{tpu_custom_call.1} parent=5 // pred_check
        _
      $region30: #{tpu_custom_call.1} parent=5 // pred_check_branch
        %230 = sbr.rel (%p227) target = $region32
      $region31: #{tpu_custom_call.1} parent=5 // pred_region
        %s231 = ssub.s32 %s18, 1
        %s232 = sand.u32 %s45, 1
        %s233 = scalar_lea.sflag [#allocation3], %s232
        %s234 = sand.u32 %s45, 1
        %s235 = smul.addr %s234, 1024
        %s236 = scalar_lea.vmem [#allocation2], %s235
        // Predicated region
        $region33: #{tpu_custom_call.1} parent=31 // pred_check
          %p237 = pneg %p58
        $region34: #{tpu_custom_call.1} parent=31 // pred_check_branch
          %239 = sbr.rel (%p237) target = $region36
        $region35: #{tpu_custom_call.1} parent=31 // pred_region
          %240 = dma.done %s233, 16384
        $region36: #{tpu_custom_call.1} parent=31 // pred_fallthru
          _
        %s241 = sand.u32 %s23, 1
        %s242 = scalar_lea.sflag [#allocation6], %s241
        %s243 = sand.u32 %s73, 1
        %s244 = smul.addr %s243, 1024
        %s245 = scalar_lea.vmem [#allocation5], %s244
        // Predicated region
        $region37: #{tpu_custom_call.1} parent=31 // pred_check
          %p246 = pneg %p86
        $region38: #{tpu_custom_call.1} parent=31 // pred_check_branch
          %248 = sbr.rel (%p246) target = $region40
        $region39: #{tpu_custom_call.1} parent=31 // pred_region
          %249 = dma.done %s242, 16384
        $region40: #{tpu_custom_call.1} parent=31 // pred_fallthru
          _
        %s250 = sand.u32 %s23, 1
        %s251 = scalar_lea.sflag [#allocation6], %s250
        %s252 = sand.u32 %s101, 1
        %s253 = smul.addr %s252, 1024
        %s254 = scalar_lea.vmem [#allocation7], %s253
        // Predicated region
        $region41: #{tpu_custom_call.1} parent=31 // pred_check
          %p255 = pneg %p114
        $region42: #{tpu_custom_call.1} parent=31 // pred_check_branch
          %257 = sbr.rel (%p255) target = $region44
        $region43: #{tpu_custom_call.1} parent=31 // pred_region
          %258 = dma.done %s251, 16384
        $region44: #{tpu_custom_call.1} parent=31 // pred_fallthru
          _
        %s259 = sand.u32 %s45, 1
        %s260 = scalar_lea.sflag [#allocation3], %s259
        %s261 = sand.u32 %s45, 1
        %s262 = smul.addr %s261, 1024
        %s263 = scalar_lea.vmem [#allocation2], %s262
        %p264 = pneg %p58
        %p265 = pneg %p55
        %s266 = sand.u32 %s23, 1
        %s267 = scalar_lea.sflag [#allocation6], %s266
        %s268 = sand.u32 %s73, 1
        %s269 = smul.addr %s268, 1024
        %s270 = scalar_lea.vmem [#allocation5], %s269
        %p271 = pneg %p86
        %p272 = pneg %p83
        %s273 = sand.u32 %s23, 1
        %s274 = scalar_lea.sflag [#allocation6], %s273
        %s275 = sand.u32 %s101, 1
        %s276 = smul.addr %s275, 1024
        %s277 = scalar_lea.vmem [#allocation7], %s276
        %p278 = pneg %p114
        %p279 = pneg %p111
        %p280 = pneg %p140
        %p281 = pneg %p137
        %s282 = sand.u32 %s127, 1
        %s283 = scalar_lea.sflag [#allocation4], %s282
        %s284 = sand.u32 %s127, 1
        %s285 = smul.addr %s284, 16
        %s286 = scalar_lea.vmem [#allocation8], %s285
        %s287 = sadd.s32 %s27, %s28
        %s288 = smul.u32 128, %s287
        %s289 = sadd.s32 %s27, %s28
        %s290 = smul.u32 128, %s289
        %s291 = sadd.s32 %s27, %s28
        %s292 = smul.u32 128, %s291
        %p293 = scmp.eq.s32.totalorder %s28, 0
        // Predicated region
        $region45: #{tpu_custom_call.1} parent=31 // pred_check
          %p294 = pneg %p293
        $region46: #{tpu_custom_call.1} parent=31 // pred_check_branch
          %296 = sbr.rel (%p294) target = $region48
        $region47: #{tpu_custom_call.1} parent=31 // pred_region
          %297 = vst [vmem:[%s286] sm:$0xff] 0.0
          %298 = vst [vmem:[%s286 + $0x8] sm:$0xff] 0.0
        $region48: #{tpu_custom_call.1} parent=31 // pred_fallthru
          _
        %v299 = vld [vmem:[%s236] sm:$0xff]
        %v300 = vld [vmem:[%s236 + $0x8] sm:$0xff]
        %v301 = vld [vmem:[%s236 + $0x10] sm:$0xff]
        %v302 = vld [vmem:[%s236 + $0x18] sm:$0xff]
        %v303 = vld [vmem:[%s236 + $0x20] sm:$0xff]
        %v304 = vld [vmem:[%s236 + $0x28] sm:$0xff]
        %v305 = vld [vmem:[%s236 + $0x30] sm:$0xff]
        %v306 = vld [vmem:[%s236 + $0x38] sm:$0xff]
        %v307 = vld [vmem:[%s236 + $0x40] sm:$0xff]
        %v308 = vld [vmem:[%s236 + $0x48] sm:$0xff]
        %v309 = vld [vmem:[%s236 + $0x50] sm:$0xff]
        %v310 = vld [vmem:[%s236 + $0x58] sm:$0xff]
        %v311 = vld [vmem:[%s236 + $0x60] sm:$0xff]
        %v312 = vld [vmem:[%s236 + $0x68] sm:$0xff]
        %v313 = vld [vmem:[%s236 + $0x70] sm:$0xff]
        %v314 = vld [vmem:[%s236 + $0x78] sm:$0xff]
        %v315 = vld [vmem:[%s236 + $0x80] sm:$0xff]
        %v316 = vld [vmem:[%s236 + $0x88] sm:$0xff]
        %v317 = vld [vmem:[%s236 + $0x90] sm:$0xff]
        %v318 = vld [vmem:[%s236 + $0x98] sm:$0xff]
        %v319 = vld [vmem:[%s236 + $0xa0] sm:$0xff]
        %v320 = vld [vmem:[%s236 + $0xa8] sm:$0xff]
        %v321 = vld [vmem:[%s236 + $0xb0] sm:$0xff]
        %v322 = vld [vmem:[%s236 + $0xb8] sm:$0xff]
        %v323 = vld [vmem:[%s236 + $0xc0] sm:$0xff]
        %v324 = vld [vmem:[%s236 + $0xc8] sm:$0xff]
        %v325 = vld [vmem:[%s236 + $0xd0] sm:$0xff]
        %v326 = vld [vmem:[%s236 + $0xd8] sm:$0xff]
        %v327 = vld [vmem:[%s236 + $0xe0] sm:$0xff]
        %v328 = vld [vmem:[%s236 + $0xe8] sm:$0xff]
        %v329 = vld [vmem:[%s236 + $0xf0] sm:$0xff]
        %v330 = vld [vmem:[%s236 + $0xf8] sm:$0xff]
        %v331 = vld [vmem:[%s236 + $0x100] sm:$0xff]
        %v332 = vld [vmem:[%s236 + $0x108] sm:$0xff]
        %v333 = vld [vmem:[%s236 + $0x110] sm:$0xff]
        %v334 = vld [vmem:[%s236 + $0x118] sm:$0xff]
        %v335 = vld [vmem:[%s236 + $0x120] sm:$0xff]
        %v336 = vld [vmem:[%s236 + $0x128] sm:$0xff]
        %v337 = vld [vmem:[%s236 + $0x130] sm:$0xff]
        %v338 = vld [vmem:[%s236 + $0x138] sm:$0xff]
        %v339 = vld [vmem:[%s236 + $0x140] sm:$0xff]
        %v340 = vld [vmem:[%s236 + $0x148] sm:$0xff]
        %v341 = vld [vmem:[%s236 + $0x150] sm:$0xff]
        %v342 = vld [vmem:[%s236 + $0x158] sm:$0xff]
        %v343 = vld [vmem:[%s236 + $0x160] sm:$0xff]
        %v344 = vld [vmem:[%s236 + $0x168] sm:$0xff]
        %v345 = vld [vmem:[%s236 + $0x170] sm:$0xff]
        %v346 = vld [vmem:[%s236 + $0x178] sm:$0xff]
        %v347 = vld [vmem:[%s236 + $0x180] sm:$0xff]
        %v348 = vld [vmem:[%s236 + $0x188] sm:$0xff]
        %v349 = vld [vmem:[%s236 + $0x190] sm:$0xff]
        %v350 = vld [vmem:[%s236 + $0x198] sm:$0xff]
        %v351 = vld [vmem:[%s236 + $0x1a0] sm:$0xff]
        %v352 = vld [vmem:[%s236 + $0x1a8] sm:$0xff]
        %v353 = vld [vmem:[%s236 + $0x1b0] sm:$0xff]
        %v354 = vld [vmem:[%s236 + $0x1b8] sm:$0xff]
        %v355 = vld [vmem:[%s236 + $0x1c0] sm:$0xff]
        %v356 = vld [vmem:[%s236 + $0x1c8] sm:$0xff]
        %v357 = vld [vmem:[%s236 + $0x1d0] sm:$0xff]
        %v358 = vld [vmem:[%s236 + $0x1d8] sm:$0xff]
        %v359 = vld [vmem:[%s236 + $0x1e0] sm:$0xff]
        %v360 = vld [vmem:[%s236 + $0x1e8] sm:$0xff]
        %v361 = vld [vmem:[%s236 + $0x1f0] sm:$0xff]
        %v362 = vld [vmem:[%s236 + $0x1f8] sm:$0xff]
        %v363 = vld [vmem:[%s236 + $0x200] sm:$0xff]
        %v364 = vld [vmem:[%s236 + $0x208] sm:$0xff]
        %v365 = vld [vmem:[%s236 + $0x210] sm:$0xff]
        %v366 = vld [vmem:[%s236 + $0x218] sm:$0xff]
        %v367 = vld [vmem:[%s236 + $0x220] sm:$0xff]
        %v368 = vld [vmem:[%s236 + $0x228] sm:$0xff]
        %v369 = vld [vmem:[%s236 + $0x230] sm:$0xff]
        %v370 = vld [vmem:[%s236 + $0x238] sm:$0xff]
        %v371 = vld [vmem:[%s236 + $0x240] sm:$0xff]
        %v372 = vld [vmem:[%s236 + $0x248] sm:$0xff]
        %v373 = vld [vmem:[%s236 + $0x250] sm:$0xff]
        %v374 = vld [vmem:[%s236 + $0x258] sm:$0xff]
        %v375 = vld [vmem:[%s236 + $0x260] sm:$0xff]
        %v376 = vld [vmem:[%s236 + $0x268] sm:$0xff]
        %v377 = vld [vmem:[%s236 + $0x270] sm:$0xff]
        %v378 = vld [vmem:[%s236 + $0x278] sm:$0xff]
        %v379 = vld [vmem:[%s236 + $0x280] sm:$0xff]
        %v380 = vld [vmem:[%s236 + $0x288] sm:$0xff]
        %v381 = vld [vmem:[%s236 + $0x290] sm:$0xff]
        %v382 = vld [vmem:[%s236 + $0x298] sm:$0xff]
        %v383 = vld [vmem:[%s236 + $0x2a0] sm:$0xff]
        %v384 = vld [vmem:[%s236 + $0x2a8] sm:$0xff]
        %v385 = vld [vmem:[%s236 + $0x2b0] sm:$0xff]
        %v386 = vld [vmem:[%s236 + $0x2b8] sm:$0xff]
        %v387 = vld [vmem:[%s236 + $0x2c0] sm:$0xff]
        %v388 = vld [vmem:[%s236 + $0x2c8] sm:$0xff]
        %v389 = vld [vmem:[%s236 + $0x2d0] sm:$0xff]
        %v390 = vld [vmem:[%s236 + $0x2d8] sm:$0xff]
        %v391 = vld [vmem:[%s236 + $0x2e0] sm:$0xff]
        %v392 = vld [vmem:[%s236 + $0x2e8] sm:$0xff]
        %v393 = vld [vmem:[%s236 + $0x2f0] sm:$0xff]
        %v394 = vld [vmem:[%s236 + $0x2f8] sm:$0xff]
        %v395 = vld [vmem:[%s236 + $0x300] sm:$0xff]
        %v396 = vld [vmem:[%s236 + $0x308] sm:$0xff]
        %v397 = vld [vmem:[%s236 + $0x310] sm:$0xff]
        %v398 = vld [vmem:[%s236 + $0x318] sm:$0xff]
        %v399 = vld [vmem:[%s236 + $0x320] sm:$0xff]
        %v400 = vld [vmem:[%s236 + $0x328] sm:$0xff]
        %v401 = vld [vmem:[%s236 + $0x330] sm:$0xff]
        %v402 = vld [vmem:[%s236 + $0x338] sm:$0xff]
        %v403 = vld [vmem:[%s236 + $0x340] sm:$0xff]
        %v404 = vld [vmem:[%s236 + $0x348] sm:$0xff]
        %v405 = vld [vmem:[%s236 + $0x350] sm:$0xff]
        %v406 = vld [vmem:[%s236 + $0x358] sm:$0xff]
        %v407 = vld [vmem:[%s236 + $0x360] sm:$0xff]
        %v408 = vld [vmem:[%s236 + $0x368] sm:$0xff]
        %v409 = vld [vmem:[%s236 + $0x370] sm:$0xff]
        %v410 = vld [vmem:[%s236 + $0x378] sm:$0xff]
        %v411 = vld [vmem:[%s236 + $0x380] sm:$0xff]
        %v412 = vld [vmem:[%s236 + $0x388] sm:$0xff]
        %v413 = vld [vmem:[%s236 + $0x390] sm:$0xff]
        %v414 = vld [vmem:[%s236 + $0x398] sm:$0xff]
        %v415 = vld [vmem:[%s236 + $0x3a0] sm:$0xff]
        %v416 = vld [vmem:[%s236 + $0x3a8] sm:$0xff]
        %v417 = vld [vmem:[%s236 + $0x3b0] sm:$0xff]
        %v418 = vld [vmem:[%s236 + $0x3b8] sm:$0xff]
        %v419 = vld [vmem:[%s236 + $0x3c0] sm:$0xff]
        %v420 = vld [vmem:[%s236 + $0x3c8] sm:$0xff]
        %v421 = vld [vmem:[%s236 + $0x3d0] sm:$0xff]
        %v422 = vld [vmem:[%s236 + $0x3d8] sm:$0xff]
        %v423 = vld [vmem:[%s236 + $0x3e0] sm:$0xff]
        %v424 = vld [vmem:[%s236 + $0x3e8] sm:$0xff]
        %v425 = vld [vmem:[%s236 + $0x3f0] sm:$0xff]
        %v426 = vld [vmem:[%s236 + $0x3f8] sm:$0xff]
        %v427 = vld [vmem:[%s245] sm:$0xff]
        %v428 = vld [vmem:[%s245 + $0x8] sm:$0xff]
        %v429 = vld [vmem:[%s245 + $0x10] sm:$0xff]
        %v430 = vld [vmem:[%s245 + $0x18] sm:$0xff]
        %v431 = vld [vmem:[%s245 + $0x20] sm:$0xff]
        %v432 = vld [vmem:[%s245 + $0x28] sm:$0xff]
        %v433 = vld [vmem:[%s245 + $0x30] sm:$0xff]
        %v434 = vld [vmem:[%s245 + $0x38] sm:$0xff]
        %v435 = vld [vmem:[%s245 + $0x40] sm:$0xff]
        %v436 = vld [vmem:[%s245 + $0x48] sm:$0xff]
        %v437 = vld [vmem:[%s245 + $0x50] sm:$0xff]
        %v438 = vld [vmem:[%s245 + $0x58] sm:$0xff]
        %v439 = vld [vmem:[%s245 + $0x60] sm:$0xff]
        %v440 = vld [vmem:[%s245 + $0x68] sm:$0xff]
        %v441 = vld [vmem:[%s245 + $0x70] sm:$0xff]
        %v442 = vld [vmem:[%s245 + $0x78] sm:$0xff]
        %v443 = vld [vmem:[%s245 + $0x80] sm:$0xff]
        %v444 = vld [vmem:[%s245 + $0x88] sm:$0xff]
        %v445 = vld [vmem:[%s245 + $0x90] sm:$0xff]
        %v446 = vld [vmem:[%s245 + $0x98] sm:$0xff]
        %v447 = vld [vmem:[%s245 + $0xa0] sm:$0xff]
        %v448 = vld [vmem:[%s245 + $0xa8] sm:$0xff]
        %v449 = vld [vmem:[%s245 + $0xb0] sm:$0xff]
        %v450 = vld [vmem:[%s245 + $0xb8] sm:$0xff]
        %v451 = vld [vmem:[%s245 + $0xc0] sm:$0xff]
        %v452 = vld [vmem:[%s245 + $0xc8] sm:$0xff]
        %v453 = vld [vmem:[%s245 + $0xd0] sm:$0xff]
        %v454 = vld [vmem:[%s245 + $0xd8] sm:$0xff]
        %v455 = vld [vmem:[%s245 + $0xe0] sm:$0xff]
        %v456 = vld [vmem:[%s245 + $0xe8] sm:$0xff]
        %v457 = vld [vmem:[%s245 + $0xf0] sm:$0xff]
        %v458 = vld [vmem:[%s245 + $0xf8] sm:$0xff]
        %v459 = vld [vmem:[%s245 + $0x100] sm:$0xff]
        %v460 = vld [vmem:[%s245 + $0x108] sm:$0xff]
        %v461 = vld [vmem:[%s245 + $0x110] sm:$0xff]
        %v462 = vld [vmem:[%s245 + $0x118] sm:$0xff]
        %v463 = vld [vmem:[%s245 + $0x120] sm:$0xff]
        %v464 = vld [vmem:[%s245 + $0x128] sm:$0xff]
        %v465 = vld [vmem:[%s245 + $0x130] sm:$0xff]
        %v466 = vld [vmem:[%s245 + $0x138] sm:$0xff]
        %v467 = vld [vmem:[%s245 + $0x140] sm:$0xff]
        %v468 = vld [vmem:[%s245 + $0x148] sm:$0xff]
        %v469 = vld [vmem:[%s245 + $0x150] sm:$0xff]
        %v470 = vld [vmem:[%s245 + $0x158] sm:$0xff]
        %v471 = vld [vmem:[%s245 + $0x160] sm:$0xff]
        %v472 = vld [vmem:[%s245 + $0x168] sm:$0xff]
        %v473 = vld [vmem:[%s245 + $0x170] sm:$0xff]
        %v474 = vld [vmem:[%s245 + $0x178] sm:$0xff]
        %v475 = vld [vmem:[%s245 + $0x180] sm:$0xff]
        %v476 = vld [vmem:[%s245 + $0x188] sm:$0xff]
        %v477 = vld [vmem:[%s245 + $0x190] sm:$0xff]
        %v478 = vld [vmem:[%s245 + $0x198] sm:$0xff]
        %v479 = vld [vmem:[%s245 + $0x1a0] sm:$0xff]
        %v480 = vld [vmem:[%s245 + $0x1a8] sm:$0xff]
        %v481 = vld [vmem:[%s245 + $0x1b0] sm:$0xff]
        %v482 = vld [vmem:[%s245 + $0x1b8] sm:$0xff]
        %v483 = vld [vmem:[%s245 + $0x1c0] sm:$0xff]
        %v484 = vld [vmem:[%s245 + $0x1c8] sm:$0xff]
        %v485 = vld [vmem:[%s245 + $0x1d0] sm:$0xff]
        %v486 = vld [vmem:[%s245 + $0x1d8] sm:$0xff]
        %v487 = vld [vmem:[%s245 + $0x1e0] sm:$0xff]
        %v488 = vld [vmem:[%s245 + $0x1e8] sm:$0xff]
        %v489 = vld [vmem:[%s245 + $0x1f0] sm:$0xff]
        %v490 = vld [vmem:[%s245 + $0x1f8] sm:$0xff]
        %v491 = vld [vmem:[%s245 + $0x200] sm:$0xff]
        %v492 = vld [vmem:[%s245 + $0x208] sm:$0xff]
        %v493 = vld [vmem:[%s245 + $0x210] sm:$0xff]
        %v494 = vld [vmem:[%s245 + $0x218] sm:$0xff]
        %v495 = vld [vmem:[%s245 + $0x220] sm:$0xff]
        %v496 = vld [vmem:[%s245 + $0x228] sm:$0xff]
        %v497 = vld [vmem:[%s245 + $0x230] sm:$0xff]
        %v498 = vld [vmem:[%s245 + $0x238] sm:$0xff]
        %v499 = vld [vmem:[%s245 + $0x240] sm:$0xff]
        %v500 = vld [vmem:[%s245 + $0x248] sm:$0xff]
        %v501 = vld [vmem:[%s245 + $0x250] sm:$0xff]
        %v502 = vld [vmem:[%s245 + $0x258] sm:$0xff]
        %v503 = vld [vmem:[%s245 + $0x260] sm:$0xff]
        %v504 = vld [vmem:[%s245 + $0x268] sm:$0xff]
        %v505 = vld [vmem:[%s245 + $0x270] sm:$0xff]
        %v506 = vld [vmem:[%s245 + $0x278] sm:$0xff]
        %v507 = vld [vmem:[%s245 + $0x280] sm:$0xff]
        %v508 = vld [vmem:[%s245 + $0x288] sm:$0xff]
        %v509 = vld [vmem:[%s245 + $0x290] sm:$0xff]
        %v510 = vld [vmem:[%s245 + $0x298] sm:$0xff]
        %v511 = vld [vmem:[%s245 + $0x2a0] sm:$0xff]
        %v512 = vld [vmem:[%s245 + $0x2a8] sm:$0xff]
        %v513 = vld [vmem:[%s245 + $0x2b0] sm:$0xff]
        %v514 = vld [vmem:[%s245 + $0x2b8] sm:$0xff]
        %v515 = vld [vmem:[%s245 + $0x2c0] sm:$0xff]
        %v516 = vld [vmem:[%s245 + $0x2c8] sm:$0xff]
        %v517 = vld [vmem:[%s245 + $0x2d0] sm:$0xff]
        %v518 = vld [vmem:[%s245 + $0x2d8] sm:$0xff]
        %v519 = vld [vmem:[%s245 + $0x2e0] sm:$0xff]
        %v520 = vld [vmem:[%s245 + $0x2e8] sm:$0xff]
        %v521 = vld [vmem:[%s245 + $0x2f0] sm:$0xff]
        %v522 = vld [vmem:[%s245 + $0x2f8] sm:$0xff]
        %v523 = vld [vmem:[%s245 + $0x300] sm:$0xff]
        %v524 = vld [vmem:[%s245 + $0x308] sm:$0xff]
        %v525 = vld [vmem:[%s245 + $0x310] sm:$0xff]
        %v526 = vld [vmem:[%s245 + $0x318] sm:$0xff]
        %v527 = vld [vmem:[%s245 + $0x320] sm:$0xff]
        %v528 = vld [vmem:[%s245 + $0x328] sm:$0xff]
        %v529 = vld [vmem:[%s245 + $0x330] sm:$0xff]
        %v530 = vld [vmem:[%s245 + $0x338] sm:$0xff]
        %v531 = vld [vmem:[%s245 + $0x340] sm:$0xff]
        %v532 = vld [vmem:[%s245 + $0x348] sm:$0xff]
        %v533 = vld [vmem:[%s245 + $0x350] sm:$0xff]
        %v534 = vld [vmem:[%s245 + $0x358] sm:$0xff]
        %v535 = vld [vmem:[%s245 + $0x360] sm:$0xff]
        %v536 = vld [vmem:[%s245 + $0x368] sm:$0xff]
        %v537 = vld [vmem:[%s245 + $0x370] sm:$0xff]
        %v538 = vld [vmem:[%s245 + $0x378] sm:$0xff]
        %v539 = vld [vmem:[%s245 + $0x380] sm:$0xff]
        %v540 = vld [vmem:[%s245 + $0x388] sm:$0xff]
        %v541 = vld [vmem:[%s245 + $0x390] sm:$0xff]
        %v542 = vld [vmem:[%s245 + $0x398] sm:$0xff]
        %v543 = vld [vmem:[%s245 + $0x3a0] sm:$0xff]
        %v544 = vld [vmem:[%s245 + $0x3a8] sm:$0xff]
        %v545 = vld [vmem:[%s245 + $0x3b0] sm:$0xff]
        %v546 = vld [vmem:[%s245 + $0x3b8] sm:$0xff]
        %v547 = vld [vmem:[%s245 + $0x3c0] sm:$0xff]
        %v548 = vld [vmem:[%s245 + $0x3c8] sm:$0xff]
        %v549 = vld [vmem:[%s245 + $0x3d0] sm:$0xff]
        %v550 = vld [vmem:[%s245 + $0x3d8] sm:$0xff]
        %v551 = vld [vmem:[%s245 + $0x3e0] sm:$0xff]
        %v552 = vld [vmem:[%s245 + $0x3e8] sm:$0xff]
        %v553 = vld [vmem:[%s245 + $0x3f0] sm:$0xff]
        %v554 = vld [vmem:[%s245 + $0x3f8] sm:$0xff]
        %v555 = vsub.f32 %v299, %v427
        %v556 = vsub.f32 %v300, %v428
        %v557 = vsub.f32 %v301, %v429
        %v558 = vsub.f32 %v302, %v430
        %v559 = vsub.f32 %v303, %v431
        %v560 = vsub.f32 %v304, %v432
        %v561 = vsub.f32 %v305, %v433
        %v562 = vsub.f32 %v306, %v434
        %v563 = vsub.f32 %v307, %v435
        %v564 = vsub.f32 %v308, %v436
        %v565 = vsub.f32 %v309, %v437
        %v566 = vsub.f32 %v310, %v438
        %v567 = vsub.f32 %v311, %v439
        %v568 = vsub.f32 %v312, %v440
        %v569 = vsub.f32 %v313, %v441
        %v570 = vsub.f32 %v314, %v442
        %v571 = vsub.f32 %v315, %v443
        %v572 = vsub.f32 %v316, %v444
        %v573 = vsub.f32 %v317, %v445
        %v574 = vsub.f32 %v318, %v446
        %v575 = vsub.f32 %v319, %v447
        %v576 = vsub.f32 %v320, %v448
        %v577 = vsub.f32 %v321, %v449
        %v578 = vsub.f32 %v322, %v450
        %v579 = vsub.f32 %v323, %v451
        %v580 = vsub.f32 %v324, %v452
        %v581 = vsub.f32 %v325, %v453
        %v582 = vsub.f32 %v326, %v454
        %v583 = vsub.f32 %v327, %v455
        %v584 = vsub.f32 %v328, %v456
        %v585 = vsub.f32 %v329, %v457
        %v586 = vsub.f32 %v330, %v458
        %v587 = vsub.f32 %v331, %v459
        %v588 = vsub.f32 %v332, %v460
        %v589 = vsub.f32 %v333, %v461
        %v590 = vsub.f32 %v334, %v462
        %v591 = vsub.f32 %v335, %v463
        %v592 = vsub.f32 %v336, %v464
        %v593 = vsub.f32 %v337, %v465
        %v594 = vsub.f32 %v338, %v466
        %v595 = vsub.f32 %v339, %v467
        %v596 = vsub.f32 %v340, %v468
        %v597 = vsub.f32 %v341, %v469
        %v598 = vsub.f32 %v342, %v470
        %v599 = vsub.f32 %v343, %v471
        %v600 = vsub.f32 %v344, %v472
        %v601 = vsub.f32 %v345, %v473
        %v602 = vsub.f32 %v346, %v474
        %v603 = vsub.f32 %v347, %v475
        %v604 = vsub.f32 %v348, %v476
        %v605 = vsub.f32 %v349, %v477
        %v606 = vsub.f32 %v350, %v478
        %v607 = vsub.f32 %v351, %v479
        %v608 = vsub.f32 %v352, %v480
        %v609 = vsub.f32 %v353, %v481
        %v610 = vsub.f32 %v354, %v482
        %v611 = vsub.f32 %v355, %v483
        %v612 = vsub.f32 %v356, %v484
        %v613 = vsub.f32 %v357, %v485
        %v614 = vsub.f32 %v358, %v486
        %v615 = vsub.f32 %v359, %v487
        %v616 = vsub.f32 %v360, %v488
        %v617 = vsub.f32 %v361, %v489
        %v618 = vsub.f32 %v362, %v490
        %v619 = vsub.f32 %v363, %v491
        %v620 = vsub.f32 %v364, %v492
        %v621 = vsub.f32 %v365, %v493
        %v622 = vsub.f32 %v366, %v494
        %v623 = vsub.f32 %v367, %v495
        %v624 = vsub.f32 %v368, %v496
        %v625 = vsub.f32 %v369, %v497
        %v626 = vsub.f32 %v370, %v498
        %v627 = vsub.f32 %v371, %v499
        %v628 = vsub.f32 %v372, %v500
        %v629 = vsub.f32 %v373, %v501
        %v630 = vsub.f32 %v374, %v502
        %v631 = vsub.f32 %v375, %v503
        %v632 = vsub.f32 %v376, %v504
        %v633 = vsub.f32 %v377, %v505
        %v634 = vsub.f32 %v378, %v506
        %v635 = vsub.f32 %v379, %v507
        %v636 = vsub.f32 %v380, %v508
        %v637 = vsub.f32 %v381, %v509
        %v638 = vsub.f32 %v382, %v510
        %v639 = vsub.f32 %v383, %v511
        %v640 = vsub.f32 %v384, %v512
        %v641 = vsub.f32 %v385, %v513
        %v642 = vsub.f32 %v386, %v514
        %v643 = vsub.f32 %v387, %v515
        %v644 = vsub.f32 %v388, %v516
        %v645 = vsub.f32 %v389, %v517
        %v646 = vsub.f32 %v390, %v518
        %v647 = vsub.f32 %v391, %v519
        %v648 = vsub.f32 %v392, %v520
        %v649 = vsub.f32 %v393, %v521
        %v650 = vsub.f32 %v394, %v522
        %v651 = vsub.f32 %v395, %v523
        %v652 = vsub.f32 %v396, %v524
        %v653 = vsub.f32 %v397, %v525
        %v654 = vsub.f32 %v398, %v526
        %v655 = vsub.f32 %v399, %v527
        %v656 = vsub.f32 %v400, %v528
        %v657 = vsub.f32 %v401, %v529
        %v658 = vsub.f32 %v402, %v530
        %v659 = vsub.f32 %v403, %v531
        %v660 = vsub.f32 %v404, %v532
        %v661 = vsub.f32 %v405, %v533
        %v662 = vsub.f32 %v406, %v534
        %v663 = vsub.f32 %v407, %v535
        %v664 = vsub.f32 %v408, %v536
        %v665 = vsub.f32 %v409, %v537
        %v666 = vsub.f32 %v410, %v538
        %v667 = vsub.f32 %v411, %v539
        %v668 = vsub.f32 %v412, %v540
        %v669 = vsub.f32 %v413, %v541
        %v670 = vsub.f32 %v414, %v542
        %v671 = vsub.f32 %v415, %v543
        %v672 = vsub.f32 %v416, %v544
        %v673 = vsub.f32 %v417, %v545
        %v674 = vsub.f32 %v418, %v546
        %v675 = vsub.f32 %v419, %v547
        %v676 = vsub.f32 %v420, %v548
        %v677 = vsub.f32 %v421, %v549
        %v678 = vsub.f32 %v422, %v550
        %v679 = vsub.f32 %v423, %v551
        %v680 = vsub.f32 %v424, %v552
        %v681 = vsub.f32 %v425, %v553
        %v682 = vsub.f32 %v426, %v554
        %v683 = vld [vmem:[%s286] sm:$0xff]
        %v684 = vmul.f32 %v555, %v555
        %v685 = vmul.f32 %v556, %v556
        %v686 = vmul.f32 %v557, %v557
        %v687 = vmul.f32 %v558, %v558
        %v688 = vmul.f32 %v559, %v559
        %v689 = vmul.f32 %v560, %v560
        %v690 = vmul.f32 %v561, %v561
        %v691 = vmul.f32 %v562, %v562
        %v692 = vmul.f32 %v563, %v563
        %v693 = vmul.f32 %v564, %v564
        %v694 = vmul.f32 %v565, %v565
        %v695 = vmul.f32 %v566, %v566
        %v696 = vmul.f32 %v567, %v567
        %v697 = vmul.f32 %v568, %v568
        %v698 = vmul.f32 %v569, %v569
        %v699 = vmul.f32 %v570, %v570
        %v700 = vmul.f32 %v571, %v571
        %v701 = vmul.f32 %v572, %v572
        %v702 = vmul.f32 %v573, %v573
        %v703 = vmul.f32 %v574, %v574
        %v704 = vmul.f32 %v575, %v575
        %v705 = vmul.f32 %v576, %v576
        %v706 = vmul.f32 %v577, %v577
        %v707 = vmul.f32 %v578, %v578
        %v708 = vmul.f32 %v579, %v579
        %v709 = vmul.f32 %v580, %v580
        %v710 = vmul.f32 %v581, %v581
        %v711 = vmul.f32 %v582, %v582
        %v712 = vmul.f32 %v583, %v583
        %v713 = vmul.f32 %v584, %v584
        %v714 = vmul.f32 %v585, %v585
        %v715 = vmul.f32 %v586, %v586
        %v716 = vmul.f32 %v587, %v587
        %v717 = vmul.f32 %v588, %v588
        %v718 = vmul.f32 %v589, %v589
        %v719 = vmul.f32 %v590, %v590
        %v720 = vmul.f32 %v591, %v591
        %v721 = vmul.f32 %v592, %v592
        %v722 = vmul.f32 %v593, %v593
        %v723 = vmul.f32 %v594, %v594
        %v724 = vmul.f32 %v595, %v595
        %v725 = vmul.f32 %v596, %v596
        %v726 = vmul.f32 %v597, %v597
        %v727 = vmul.f32 %v598, %v598
        %v728 = vmul.f32 %v599, %v599
        %v729 = vmul.f32 %v600, %v600
        %v730 = vmul.f32 %v601, %v601
        %v731 = vmul.f32 %v602, %v602
        %v732 = vmul.f32 %v603, %v603
        %v733 = vmul.f32 %v604, %v604
        %v734 = vmul.f32 %v605, %v605
        %v735 = vmul.f32 %v606, %v606
        %v736 = vmul.f32 %v607, %v607
        %v737 = vmul.f32 %v608, %v608
        %v738 = vmul.f32 %v609, %v609
        %v739 = vmul.f32 %v610, %v610
        %v740 = vmul.f32 %v611, %v611
        %v741 = vmul.f32 %v612, %v612
        %v742 = vmul.f32 %v613, %v613
        %v743 = vmul.f32 %v614, %v614
        %v744 = vmul.f32 %v615, %v615
        %v745 = vmul.f32 %v616, %v616
        %v746 = vmul.f32 %v617, %v617
        %v747 = vmul.f32 %v618, %v618
        %v748 = vmul.f32 %v619, %v619
        %v749 = vmul.f32 %v620, %v620
        %v750 = vmul.f32 %v621, %v621
        %v751 = vmul.f32 %v622, %v622
        %v752 = vmul.f32 %v623, %v623
        %v753 = vmul.f32 %v624, %v624
        %v754 = vmul.f32 %v625, %v625
        %v755 = vmul.f32 %v626, %v626
        %v756 = vmul.f32 %v627, %v627
        %v757 = vmul.f32 %v628, %v628
        %v758 = vmul.f32 %v629, %v629
        %v759 = vmul.f32 %v630, %v630
        %v760 = vmul.f32 %v631, %v631
        %v761 = vmul.f32 %v632, %v632
        %v762 = vmul.f32 %v633, %v633
        %v763 = vmul.f32 %v634, %v634
        %v764 = vmul.f32 %v635, %v635
        %v765 = vmul.f32 %v636, %v636
        %v766 = vmul.f32 %v637, %v637
        %v767 = vmul.f32 %v638, %v638
        %v768 = vmul.f32 %v639, %v639
        %v769 = vmul.f32 %v640, %v640
        %v770 = vmul.f32 %v641, %v641
        %v771 = vmul.f32 %v642, %v642
        %v772 = vmul.f32 %v643, %v643
        %v773 = vmul.f32 %v644, %v644
        %v774 = vmul.f32 %v645, %v645
        %v775 = vmul.f32 %v646, %v646
        %v776 = vmul.f32 %v647, %v647
        %v777 = vmul.f32 %v648, %v648
        %v778 = vmul.f32 %v649, %v649
        %v779 = vmul.f32 %v650, %v650
        %v780 = vmul.f32 %v651, %v651
        %v781 = vmul.f32 %v652, %v652
        %v782 = vmul.f32 %v653, %v653
        %v783 = vmul.f32 %v654, %v654
        %v784 = vmul.f32 %v655, %v655
        %v785 = vmul.f32 %v656, %v656
        %v786 = vmul.f32 %v657, %v657
        %v787 = vmul.f32 %v658, %v658
        %v788 = vmul.f32 %v659, %v659
        %v789 = vmul.f32 %v660, %v660
        %v790 = vmul.f32 %v661, %v661
        %v791 = vmul.f32 %v662, %v662
        %v792 = vmul.f32 %v663, %v663
        %v793 = vmul.f32 %v664, %v664
        %v794 = vmul.f32 %v665, %v665
        %v795 = vmul.f32 %v666, %v666
        %v796 = vmul.f32 %v667, %v667
        %v797 = vmul.f32 %v668, %v668
        %v798 = vmul.f32 %v669, %v669
        %v799 = vmul.f32 %v670, %v670
        %v800 = vmul.f32 %v671, %v671
        %v801 = vmul.f32 %v672, %v672
        %v802 = vmul.f32 %v673, %v673
        %v803 = vmul.f32 %v674, %v674
        %v804 = vmul.f32 %v675, %v675
        %v805 = vmul.f32 %v676, %v676
        %v806 = vmul.f32 %v677, %v677
        %v807 = vmul.f32 %v678, %v678
        %v808 = vmul.f32 %v679, %v679
        %v809 = vmul.f32 %v680, %v680
        %v810 = vmul.f32 %v681, %v681
        %v811 = vmul.f32 %v682, %v682
        %v812 = vadd.f32 %v684, %v685
        %v813 = vadd.f32 %v812, %v686
        %v814 = vadd.f32 %v813, %v687
        %v815 = vadd.f32 %v814, %v688
        %v816 = vadd.f32 %v815, %v689
        %v817 = vadd.f32 %v816, %v690
        %v818 = vadd.f32 %v817, %v691
        %v819 = vadd.f32 %v818, %v692
        %v820 = vadd.f32 %v819, %v693
        %v821 = vadd.f32 %v820, %v694
        %v822 = vadd.f32 %v821, %v695
        %v823 = vadd.f32 %v822, %v696
        %v824 = vadd.f32 %v823, %v697
        %v825 = vadd.f32 %v824, %v698
        %v826 = vadd.f32 %v825, %v699
        %v827 = vadd.f32 %v826, %v700
        %v828 = vadd.f32 %v827, %v701
        %v829 = vadd.f32 %v828, %v702
        %v830 = vadd.f32 %v829, %v703
        %v831 = vadd.f32 %v830, %v704
        %v832 = vadd.f32 %v831, %v705
        %v833 = vadd.f32 %v832, %v706
        %v834 = vadd.f32 %v833, %v707
        %v835 = vadd.f32 %v834, %v708
        %v836 = vadd.f32 %v835, %v709
        %v837 = vadd.f32 %v836, %v710
        %v838 = vadd.f32 %v837, %v711
        %v839 = vadd.f32 %v838, %v712
        %v840 = vadd.f32 %v839, %v713
        %v841 = vadd.f32 %v840, %v714
        %v842 = vadd.f32 %v841, %v715
        %v843 = vadd.f32 %v842, %v716
        %v844 = vadd.f32 %v843, %v717
        %v845 = vadd.f32 %v844, %v718
        %v846 = vadd.f32 %v845, %v719
        %v847 = vadd.f32 %v846, %v720
        %v848 = vadd.f32 %v847, %v721
        %v849 = vadd.f32 %v848, %v722
        %v850 = vadd.f32 %v849, %v723
        %v851 = vadd.f32 %v850, %v724
        %v852 = vadd.f32 %v851, %v725
        %v853 = vadd.f32 %v852, %v726
        %v854 = vadd.f32 %v853, %v727
        %v855 = vadd.f32 %v854, %v728
        %v856 = vadd.f32 %v855, %v729
        %v857 = vadd.f32 %v856, %v730
        %v858 = vadd.f32 %v857, %v731
        %v859 = vadd.f32 %v858, %v732
        %v860 = vadd.f32 %v859, %v733
        %v861 = vadd.f32 %v860, %v734
        %v862 = vadd.f32 %v861, %v735
        %v863 = vadd.f32 %v862, %v736
        %v864 = vadd.f32 %v863, %v737
        %v865 = vadd.f32 %v864, %v738
        %v866 = vadd.f32 %v865, %v739
        %v867 = vadd.f32 %v866, %v740
        %v868 = vadd.f32 %v867, %v741
        %v869 = vadd.f32 %v868, %v742
        %v870 = vadd.f32 %v869, %v743
        %v871 = vadd.f32 %v870, %v744
        %v872 = vadd.f32 %v871, %v745
        %v873 = vadd.f32 %v872, %v746
        %v874 = vadd.f32 %v873, %v747
        %v875 = vadd.f32 %v874, %v748
        %v876 = vadd.f32 %v875, %v749
        %v877 = vadd.f32 %v876, %v750
        %v878 = vadd.f32 %v877, %v751
        %v879 = vadd.f32 %v878, %v752
        %v880 = vadd.f32 %v879, %v753
        %v881 = vadd.f32 %v880, %v754
        %v882 = vadd.f32 %v881, %v755
        %v883 = vadd.f32 %v882, %v756
        %v884 = vadd.f32 %v883, %v757
        %v885 = vadd.f32 %v884, %v758
        %v886 = vadd.f32 %v885, %v759
        %v887 = vadd.f32 %v886, %v760
        %v888 = vadd.f32 %v887, %v761
        %v889 = vadd.f32 %v888, %v762
        %v890 = vadd.f32 %v889, %v763
        %v891 = vadd.f32 %v890, %v764
        %v892 = vadd.f32 %v891, %v765
        %v893 = vadd.f32 %v892, %v766
        %v894 = vadd.f32 %v893, %v767
        %v895 = vadd.f32 %v894, %v768
        %v896 = vadd.f32 %v895, %v769
        %v897 = vadd.f32 %v896, %v770
        %v898 = vadd.f32 %v897, %v771
        %v899 = vadd.f32 %v898, %v772
        %v900 = vadd.f32 %v899, %v773
        %v901 = vadd.f32 %v900, %v774
        %v902 = vadd.f32 %v901, %v775
        %v903 = vadd.f32 %v902, %v776
        %v904 = vadd.f32 %v903, %v777
        %v905 = vadd.f32 %v904, %v778
        %v906 = vadd.f32 %v905, %v779
        %v907 = vadd.f32 %v906, %v780
        %v908 = vadd.f32 %v907, %v781
        %v909 = vadd.f32 %v908, %v782
        %v910 = vadd.f32 %v909, %v783
        %v911 = vadd.f32 %v910, %v784
        %v912 = vadd.f32 %v911, %v785
        %v913 = vadd.f32 %v912, %v786
        %v914 = vadd.f32 %v913, %v787
        %v915 = vadd.f32 %v914, %v788
        %v916 = vadd.f32 %v915, %v789
        %v917 = vadd.f32 %v916, %v790
        %v918 = vadd.f32 %v917, %v791
        %v919 = vadd.f32 %v918, %v792
        %v920 = vadd.f32 %v919, %v793
        %v921 = vadd.f32 %v920, %v794
        %v922 = vadd.f32 %v921, %v795
        %v923 = vadd.f32 %v922, %v796
        %v924 = vadd.f32 %v923, %v797
        %v925 = vadd.f32 %v924, %v798
        %v926 = vadd.f32 %v925, %v799
        %v927 = vadd.f32 %v926, %v800
        %v928 = vadd.f32 %v927, %v801
        %v929 = vadd.f32 %v928, %v802
        %v930 = vadd.f32 %v929, %v803
        %v931 = vadd.f32 %v930, %v804
        %v932 = vadd.f32 %v931, %v805
        %v933 = vadd.f32 %v932, %v806
        %v934 = vadd.f32 %v933, %v807
        %v935 = vadd.f32 %v934, %v808
        %v936 = vadd.f32 %v935, %v809
        %v937 = vadd.f32 %v936, %v810
        %v938 = vadd.f32 %v937, %v811
        %v939 = vadd.f32 %v683, %v938
        %940 = vst [vmem:[%s286] sm:$0xff] %v939
        %v941 = vld [vmem:[%s254] sm:$0xff]
        %v942 = vld [vmem:[%s254 + $0x8] sm:$0xff]
        %v943 = vld [vmem:[%s254 + $0x10] sm:$0xff]
        %v944 = vld [vmem:[%s254 + $0x18] sm:$0xff]
        %v945 = vld [vmem:[%s254 + $0x20] sm:$0xff]
        %v946 = vld [vmem:[%s254 + $0x28] sm:$0xff]
        %v947 = vld [vmem:[%s254 + $0x30] sm:$0xff]
        %v948 = vld [vmem:[%s254 + $0x38] sm:$0xff]
        %v949 = vld [vmem:[%s254 + $0x40] sm:$0xff]
        %v950 = vld [vmem:[%s254 + $0x48] sm:$0xff]
        %v951 = vld [vmem:[%s254 + $0x50] sm:$0xff]
        %v952 = vld [vmem:[%s254 + $0x58] sm:$0xff]
        %v953 = vld [vmem:[%s254 + $0x60] sm:$0xff]
        %v954 = vld [vmem:[%s254 + $0x68] sm:$0xff]
        %v955 = vld [vmem:[%s254 + $0x70] sm:$0xff]
        %v956 = vld [vmem:[%s254 + $0x78] sm:$0xff]
        %v957 = vld [vmem:[%s254 + $0x80] sm:$0xff]
        %v958 = vld [vmem:[%s254 + $0x88] sm:$0xff]
        %v959 = vld [vmem:[%s254 + $0x90] sm:$0xff]
        %v960 = vld [vmem:[%s254 + $0x98] sm:$0xff]
        %v961 = vld [vmem:[%s254 + $0xa0] sm:$0xff]
        %v962 = vld [vmem:[%s254 + $0xa8] sm:$0xff]
        %v963 = vld [vmem:[%s254 + $0xb0] sm:$0xff]
        %v964 = vld [vmem:[%s254 + $0xb8] sm:$0xff]
        %v965 = vld [vmem:[%s254 + $0xc0] sm:$0xff]
        %v966 = vld [vmem:[%s254 + $0xc8] sm:$0xff]
        %v967 = vld [vmem:[%s254 + $0xd0] sm:$0xff]
        %v968 = vld [vmem:[%s254 + $0xd8] sm:$0xff]
        %v969 = vld [vmem:[%s254 + $0xe0] sm:$0xff]
        %v970 = vld [vmem:[%s254 + $0xe8] sm:$0xff]
        %v971 = vld [vmem:[%s254 + $0xf0] sm:$0xff]
        %v972 = vld [vmem:[%s254 + $0xf8] sm:$0xff]
        %v973 = vld [vmem:[%s254 + $0x100] sm:$0xff]
        %v974 = vld [vmem:[%s254 + $0x108] sm:$0xff]
        %v975 = vld [vmem:[%s254 + $0x110] sm:$0xff]
        %v976 = vld [vmem:[%s254 + $0x118] sm:$0xff]
        %v977 = vld [vmem:[%s254 + $0x120] sm:$0xff]
        %v978 = vld [vmem:[%s254 + $0x128] sm:$0xff]
        %v979 = vld [vmem:[%s254 + $0x130] sm:$0xff]
        %v980 = vld [vmem:[%s254 + $0x138] sm:$0xff]
        %v981 = vld [vmem:[%s254 + $0x140] sm:$0xff]
        %v982 = vld [vmem:[%s254 + $0x148] sm:$0xff]
        %v983 = vld [vmem:[%s254 + $0x150] sm:$0xff]
        %v984 = vld [vmem:[%s254 + $0x158] sm:$0xff]
        %v985 = vld [vmem:[%s254 + $0x160] sm:$0xff]
        %v986 = vld [vmem:[%s254 + $0x168] sm:$0xff]
        %v987 = vld [vmem:[%s254 + $0x170] sm:$0xff]
        %v988 = vld [vmem:[%s254 + $0x178] sm:$0xff]
        %v989 = vld [vmem:[%s254 + $0x180] sm:$0xff]
        %v990 = vld [vmem:[%s254 + $0x188] sm:$0xff]
        %v991 = vld [vmem:[%s254 + $0x190] sm:$0xff]
        %v992 = vld [vmem:[%s254 + $0x198] sm:$0xff]
        %v993 = vld [vmem:[%s254 + $0x1a0] sm:$0xff]
        %v994 = vld [vmem:[%s254 + $0x1a8] sm:$0xff]
        %v995 = vld [vmem:[%s254 + $0x1b0] sm:$0xff]
        %v996 = vld [vmem:[%s254 + $0x1b8] sm:$0xff]
        %v997 = vld [vmem:[%s254 + $0x1c0] sm:$0xff]
        %v998 = vld [vmem:[%s254 + $0x1c8] sm:$0xff]
        %v999 = vld [vmem:[%s254 + $0x1d0] sm:$0xff]
        %v1000 = vld [vmem:[%s254 + $0x1d8] sm:$0xff]
        %v1001 = vld [vmem:[%s254 + $0x1e0] sm:$0xff]
        %v1002 = vld [vmem:[%s254 + $0x1e8] sm:$0xff]
        %v1003 = vld [vmem:[%s254 + $0x1f0] sm:$0xff]
        %v1004 = vld [vmem:[%s254 + $0x1f8] sm:$0xff]
        %v1005 = vld [vmem:[%s254 + $0x200] sm:$0xff]
        %v1006 = vld [vmem:[%s254 + $0x208] sm:$0xff]
        %v1007 = vld [vmem:[%s254 + $0x210] sm:$0xff]
        %v1008 = vld [vmem:[%s254 + $0x218] sm:$0xff]
        %v1009 = vld [vmem:[%s254 + $0x220] sm:$0xff]
        %v1010 = vld [vmem:[%s254 + $0x228] sm:$0xff]
        %v1011 = vld [vmem:[%s254 + $0x230] sm:$0xff]
        %v1012 = vld [vmem:[%s254 + $0x238] sm:$0xff]
        %v1013 = vld [vmem:[%s254 + $0x240] sm:$0xff]
        %v1014 = vld [vmem:[%s254 + $0x248] sm:$0xff]
        %v1015 = vld [vmem:[%s254 + $0x250] sm:$0xff]
        %v1016 = vld [vmem:[%s254 + $0x258] sm:$0xff]
        %v1017 = vld [vmem:[%s254 + $0x260] sm:$0xff]
        %v1018 = vld [vmem:[%s254 + $0x268] sm:$0xff]
        %v1019 = vld [vmem:[%s254 + $0x270] sm:$0xff]
        %v1020 = vld [vmem:[%s254 + $0x278] sm:$0xff]
        %v1021 = vld [vmem:[%s254 + $0x280] sm:$0xff]
        %v1022 = vld [vmem:[%s254 + $0x288] sm:$0xff]
        %v1023 = vld [vmem:[%s254 + $0x290] sm:$0xff]
        %v1024 = vld [vmem:[%s254 + $0x298] sm:$0xff]
        %v1025 = vld [vmem:[%s254 + $0x2a0] sm:$0xff]
        %v1026 = vld [vmem:[%s254 + $0x2a8] sm:$0xff]
        %v1027 = vld [vmem:[%s254 + $0x2b0] sm:$0xff]
        %v1028 = vld [vmem:[%s254 + $0x2b8] sm:$0xff]
        %v1029 = vld [vmem:[%s254 + $0x2c0] sm:$0xff]
        %v1030 = vld [vmem:[%s254 + $0x2c8] sm:$0xff]
        %v1031 = vld [vmem:[%s254 + $0x2d0] sm:$0xff]
        %v1032 = vld [vmem:[%s254 + $0x2d8] sm:$0xff]
        %v1033 = vld [vmem:[%s254 + $0x2e0] sm:$0xff]
        %v1034 = vld [vmem:[%s254 + $0x2e8] sm:$0xff]
        %v1035 = vld [vmem:[%s254 + $0x2f0] sm:$0xff]
        %v1036 = vld [vmem:[%s254 + $0x2f8] sm:$0xff]
        %v1037 = vld [vmem:[%s254 + $0x300] sm:$0xff]
        %v1038 = vld [vmem:[%s254 + $0x308] sm:$0xff]
        %v1039 = vld [vmem:[%s254 + $0x310] sm:$0xff]
        %v1040 = vld [vmem:[%s254 + $0x318] sm:$0xff]
        %v1041 = vld [vmem:[%s254 + $0x320] sm:$0xff]
        %v1042 = vld [vmem:[%s254 + $0x328] sm:$0xff]
        %v1043 = vld [vmem:[%s254 + $0x330] sm:$0xff]
        %v1044 = vld [vmem:[%s254 + $0x338] sm:$0xff]
        %v1045 = vld [vmem:[%s254 + $0x340] sm:$0xff]
        %v1046 = vld [vmem:[%s254 + $0x348] sm:$0xff]
        %v1047 = vld [vmem:[%s254 + $0x350] sm:$0xff]
        %v1048 = vld [vmem:[%s254 + $0x358] sm:$0xff]
        %v1049 = vld [vmem:[%s254 + $0x360] sm:$0xff]
        %v1050 = vld [vmem:[%s254 + $0x368] sm:$0xff]
        %v1051 = vld [vmem:[%s254 + $0x370] sm:$0xff]
        %v1052 = vld [vmem:[%s254 + $0x378] sm:$0xff]
        %v1053 = vld [vmem:[%s254 + $0x380] sm:$0xff]
        %v1054 = vld [vmem:[%s254 + $0x388] sm:$0xff]
        %v1055 = vld [vmem:[%s254 + $0x390] sm:$0xff]
        %v1056 = vld [vmem:[%s254 + $0x398] sm:$0xff]
        %v1057 = vld [vmem:[%s254 + $0x3a0] sm:$0xff]
        %v1058 = vld [vmem:[%s254 + $0x3a8] sm:$0xff]
        %v1059 = vld [vmem:[%s254 + $0x3b0] sm:$0xff]
        %v1060 = vld [vmem:[%s254 + $0x3b8] sm:$0xff]
        %v1061 = vld [vmem:[%s254 + $0x3c0] sm:$0xff]
        %v1062 = vld [vmem:[%s254 + $0x3c8] sm:$0xff]
        %v1063 = vld [vmem:[%s254 + $0x3d0] sm:$0xff]
        %v1064 = vld [vmem:[%s254 + $0x3d8] sm:$0xff]
        %v1065 = vld [vmem:[%s254 + $0x3e0] sm:$0xff]
        %v1066 = vld [vmem:[%s254 + $0x3e8] sm:$0xff]
        %v1067 = vld [vmem:[%s254 + $0x3f0] sm:$0xff]
        %v1068 = vld [vmem:[%s254 + $0x3f8] sm:$0xff]
        %s1069 = scalar_lea.vmem %s286, 8 [#allocation8]
        %v1070 = vld [vmem:[%s1069] sm:$0xff]
        %v1071 = vmul.f32 %v941, %v941
        %v1072 = vmul.f32 %v942, %v942
        %v1073 = vmul.f32 %v943, %v943
        %v1074 = vmul.f32 %v944, %v944
        %v1075 = vmul.f32 %v945, %v945
        %v1076 = vmul.f32 %v946, %v946
        %v1077 = vmul.f32 %v947, %v947
        %v1078 = vmul.f32 %v948, %v948
        %v1079 = vmul.f32 %v949, %v949
        %v1080 = vmul.f32 %v950, %v950
        %v1081 = vmul.f32 %v951, %v951
        %v1082 = vmul.f32 %v952, %v952
        %v1083 = vmul.f32 %v953, %v953
        %v1084 = vmul.f32 %v954, %v954
        %v1085 = vmul.f32 %v955, %v955
        %v1086 = vmul.f32 %v956, %v956
        %v1087 = vmul.f32 %v957, %v957
        %v1088 = vmul.f32 %v958, %v958
        %v1089 = vmul.f32 %v959, %v959
        %v1090 = vmul.f32 %v960, %v960
        %v1091 = vmul.f32 %v961, %v961
        %v1092 = vmul.f32 %v962, %v962
        %v1093 = vmul.f32 %v963, %v963
        %v1094 = vmul.f32 %v964, %v964
        %v1095 = vmul.f32 %v965, %v965
        %v1096 = vmul.f32 %v966, %v966
        %v1097 = vmul.f32 %v967, %v967
        %v1098 = vmul.f32 %v968, %v968
        %v1099 = vmul.f32 %v969, %v969
        %v1100 = vmul.f32 %v970, %v970
        %v1101 = vmul.f32 %v971, %v971
        %v1102 = vmul.f32 %v972, %v972
        %v1103 = vmul.f32 %v973, %v973
        %v1104 = vmul.f32 %v974, %v974
        %v1105 = vmul.f32 %v975, %v975
        %v1106 = vmul.f32 %v976, %v976
        %v1107 = vmul.f32 %v977, %v977
        %v1108 = vmul.f32 %v978, %v978
        %v1109 = vmul.f32 %v979, %v979
        %v1110 = vmul.f32 %v980, %v980
        %v1111 = vmul.f32 %v981, %v981
        %v1112 = vmul.f32 %v982, %v982
        %v1113 = vmul.f32 %v983, %v983
        %v1114 = vmul.f32 %v984, %v984
        %v1115 = vmul.f32 %v985, %v985
        %v1116 = vmul.f32 %v986, %v986
        %v1117 = vmul.f32 %v987, %v987
        %v1118 = vmul.f32 %v988, %v988
        %v1119 = vmul.f32 %v989, %v989
        %v1120 = vmul.f32 %v990, %v990
        %v1121 = vmul.f32 %v991, %v991
        %v1122 = vmul.f32 %v992, %v992
        %v1123 = vmul.f32 %v993, %v993
        %v1124 = vmul.f32 %v994, %v994
        %v1125 = vmul.f32 %v995, %v995
        %v1126 = vmul.f32 %v996, %v996
        %v1127 = vmul.f32 %v997, %v997
        %v1128 = vmul.f32 %v998, %v998
        %v1129 = vmul.f32 %v999, %v999
        %v1130 = vmul.f32 %v1000, %v1000
        %v1131 = vmul.f32 %v1001, %v1001
        %v1132 = vmul.f32 %v1002, %v1002
        %v1133 = vmul.f32 %v1003, %v1003
        %v1134 = vmul.f32 %v1004, %v1004
        %v1135 = vmul.f32 %v1005, %v1005
        %v1136 = vmul.f32 %v1006, %v1006
        %v1137 = vmul.f32 %v1007, %v1007
        %v1138 = vmul.f32 %v1008, %v1008
        %v1139 = vmul.f32 %v1009, %v1009
        %v1140 = vmul.f32 %v1010, %v1010
        %v1141 = vmul.f32 %v1011, %v1011
        %v1142 = vmul.f32 %v1012, %v1012
        %v1143 = vmul.f32 %v1013, %v1013
        %v1144 = vmul.f32 %v1014, %v1014
        %v1145 = vmul.f32 %v1015, %v1015
        %v1146 = vmul.f32 %v1016, %v1016
        %v1147 = vmul.f32 %v1017, %v1017
        %v1148 = vmul.f32 %v1018, %v1018
        %v1149 = vmul.f32 %v1019, %v1019
        %v1150 = vmul.f32 %v1020, %v1020
        %v1151 = vmul.f32 %v1021, %v1021
        %v1152 = vmul.f32 %v1022, %v1022
        %v1153 = vmul.f32 %v1023, %v1023
        %v1154 = vmul.f32 %v1024, %v1024
        %v1155 = vmul.f32 %v1025, %v1025
        %v1156 = vmul.f32 %v1026, %v1026
        %v1157 = vmul.f32 %v1027, %v1027
        %v1158 = vmul.f32 %v1028, %v1028
        %v1159 = vmul.f32 %v1029, %v1029
        %v1160 = vmul.f32 %v1030, %v1030
        %v1161 = vmul.f32 %v1031, %v1031
        %v1162 = vmul.f32 %v1032, %v1032
        %v1163 = vmul.f32 %v1033, %v1033
        %v1164 = vmul.f32 %v1034, %v1034
        %v1165 = vmul.f32 %v1035, %v1035
        %v1166 = vmul.f32 %v1036, %v1036
        %v1167 = vmul.f32 %v1037, %v1037
        %v1168 = vmul.f32 %v1038, %v1038
        %v1169 = vmul.f32 %v1039, %v1039
        %v1170 = vmul.f32 %v1040, %v1040
        %v1171 = vmul.f32 %v1041, %v1041
        %v1172 = vmul.f32 %v1042, %v1042
        %v1173 = vmul.f32 %v1043, %v1043
        %v1174 = vmul.f32 %v1044, %v1044
        %v1175 = vmul.f32 %v1045, %v1045
        %v1176 = vmul.f32 %v1046, %v1046
        %v1177 = vmul.f32 %v1047, %v1047
        %v1178 = vmul.f32 %v1048, %v1048
        %v1179 = vmul.f32 %v1049, %v1049
        %v1180 = vmul.f32 %v1050, %v1050
        %v1181 = vmul.f32 %v1051, %v1051
        %v1182 = vmul.f32 %v1052, %v1052
        %v1183 = vmul.f32 %v1053, %v1053
        %v1184 = vmul.f32 %v1054, %v1054
        %v1185 = vmul.f32 %v1055, %v1055
        %v1186 = vmul.f32 %v1056, %v1056
        %v1187 = vmul.f32 %v1057, %v1057
        %v1188 = vmul.f32 %v1058, %v1058
        %v1189 = vmul.f32 %v1059, %v1059
        %v1190 = vmul.f32 %v1060, %v1060
        %v1191 = vmul.f32 %v1061, %v1061
        %v1192 = vmul.f32 %v1062, %v1062
        %v1193 = vmul.f32 %v1063, %v1063
        %v1194 = vmul.f32 %v1064, %v1064
        %v1195 = vmul.f32 %v1065, %v1065
        %v1196 = vmul.f32 %v1066, %v1066
        %v1197 = vmul.f32 %v1067, %v1067
        %v1198 = vmul.f32 %v1068, %v1068
        %v1199 = vadd.f32 %v1071, %v1072
        %v1200 = vadd.f32 %v1199, %v1073
        %v1201 = vadd.f32 %v1200, %v1074
        %v1202 = vadd.f32 %v1201, %v1075
        %v1203 = vadd.f32 %v1202, %v1076
        %v1204 = vadd.f32 %v1203, %v1077
        %v1205 = vadd.f32 %v1204, %v1078
        %v1206 = vadd.f32 %v1205, %v1079
        %v1207 = vadd.f32 %v1206, %v1080
        %v1208 = vadd.f32 %v1207, %v1081
        %v1209 = vadd.f32 %v1208, %v1082
        %v1210 = vadd.f32 %v1209, %v1083
        %v1211 = vadd.f32 %v1210, %v1084
        %v1212 = vadd.f32 %v1211, %v1085
        %v1213 = vadd.f32 %v1212, %v1086
        %v1214 = vadd.f32 %v1213, %v1087
        %v1215 = vadd.f32 %v1214, %v1088
        %v1216 = vadd.f32 %v1215, %v1089
        %v1217 = vadd.f32 %v1216, %v1090
        %v1218 = vadd.f32 %v1217, %v1091
        %v1219 = vadd.f32 %v1218, %v1092
        %v1220 = vadd.f32 %v1219, %v1093
        %v1221 = vadd.f32 %v1220, %v1094
        %v1222 = vadd.f32 %v1221, %v1095
        %v1223 = vadd.f32 %v1222, %v1096
        %v1224 = vadd.f32 %v1223, %v1097
        %v1225 = vadd.f32 %v1224, %v1098
        %v1226 = vadd.f32 %v1225, %v1099
        %v1227 = vadd.f32 %v1226, %v1100
        %v1228 = vadd.f32 %v1227, %v1101
        %v1229 = vadd.f32 %v1228, %v1102
        %v1230 = vadd.f32 %v1229, %v1103
        %v1231 = vadd.f32 %v1230, %v1104
        %v1232 = vadd.f32 %v1231, %v1105
        %v1233 = vadd.f32 %v1232, %v1106
        %v1234 = vadd.f32 %v1233, %v1107
        %v1235 = vadd.f32 %v1234, %v1108
        %v1236 = vadd.f32 %v1235, %v1109
        %v1237 = vadd.f32 %v1236, %v1110
        %v1238 = vadd.f32 %v1237, %v1111
        %v1239 = vadd.f32 %v1238, %v1112
        %v1240 = vadd.f32 %v1239, %v1113
        %v1241 = vadd.f32 %v1240, %v1114
        %v1242 = vadd.f32 %v1241, %v1115
        %v1243 = vadd.f32 %v1242, %v1116
        %v1244 = vadd.f32 %v1243, %v1117
        %v1245 = vadd.f32 %v1244, %v1118
        %v1246 = vadd.f32 %v1245, %v1119
        %v1247 = vadd.f32 %v1246, %v1120
        %v1248 = vadd.f32 %v1247, %v1121
        %v1249 = vadd.f32 %v1248, %v1122
        %v1250 = vadd.f32 %v1249, %v1123
        %v1251 = vadd.f32 %v1250, %v1124
        %v1252 = vadd.f32 %v1251, %v1125
        %v1253 = vadd.f32 %v1252, %v1126
        %v1254 = vadd.f32 %v1253, %v1127
        %v1255 = vadd.f32 %v1254, %v1128
        %v1256 = vadd.f32 %v1255, %v1129
        %v1257 = vadd.f32 %v1256, %v1130
        %v1258 = vadd.f32 %v1257, %v1131
        %v1259 = vadd.f32 %v1258, %v1132
        %v1260 = vadd.f32 %v1259, %v1133
        %v1261 = vadd.f32 %v1260, %v1134
        %v1262 = vadd.f32 %v1261, %v1135
        %v1263 = vadd.f32 %v1262, %v1136
        %v1264 = vadd.f32 %v1263, %v1137
        %v1265 = vadd.f32 %v1264, %v1138
        %v1266 = vadd.f32 %v1265, %v1139
        %v1267 = vadd.f32 %v1266, %v1140
        %v1268 = vadd.f32 %v1267, %v1141
        %v1269 = vadd.f32 %v1268, %v1142
        %v1270 = vadd.f32 %v1269, %v1143
        %v1271 = vadd.f32 %v1270, %v1144
        %v1272 = vadd.f32 %v1271, %v1145
        %v1273 = vadd.f32 %v1272, %v1146
        %v1274 = vadd.f32 %v1273, %v1147
        %v1275 = vadd.f32 %v1274, %v1148
        %v1276 = vadd.f32 %v1275, %v1149
        %v1277 = vadd.f32 %v1276, %v1150
        %v1278 = vadd.f32 %v1277, %v1151
        %v1279 = vadd.f32 %v1278, %v1152
        %v1280 = vadd.f32 %v1279, %v1153
        %v1281 = vadd.f32 %v1280, %v1154
        %v1282 = vadd.f32 %v1281, %v1155
        %v1283 = vadd.f32 %v1282, %v1156
        %v1284 = vadd.f32 %v1283, %v1157
        %v1285 = vadd.f32 %v1284, %v1158
        %v1286 = vadd.f32 %v1285, %v1159
        %v1287 = vadd.f32 %v1286, %v1160
        %v1288 = vadd.f32 %v1287, %v1161
        %v1289 = vadd.f32 %v1288, %v1162
        %v1290 = vadd.f32 %v1289, %v1163
        %v1291 = vadd.f32 %v1290, %v1164
        %v1292 = vadd.f32 %v1291, %v1165
        %v1293 = vadd.f32 %v1292, %v1166
        %v1294 = vadd.f32 %v1293, %v1167
        %v1295 = vadd.f32 %v1294, %v1168
        %v1296 = vadd.f32 %v1295, %v1169
        %v1297 = vadd.f32 %v1296, %v1170
        %v1298 = vadd.f32 %v1297, %v1171
        %v1299 = vadd.f32 %v1298, %v1172
        %v1300 = vadd.f32 %v1299, %v1173
        %v1301 = vadd.f32 %v1300, %v1174
        %v1302 = vadd.f32 %v1301, %v1175
        %v1303 = vadd.f32 %v1302, %v1176
        %v1304 = vadd.f32 %v1303, %v1177
        %v1305 = vadd.f32 %v1304, %v1178
        %v1306 = vadd.f32 %v1305, %v1179
        %v1307 = vadd.f32 %v1306, %v1180
        %v1308 = vadd.f32 %v1307, %v1181
        %v1309 = vadd.f32 %v1308, %v1182
        %v1310 = vadd.f32 %v1309, %v1183
        %v1311 = vadd.f32 %v1310, %v1184
        %v1312 = vadd.f32 %v1311, %v1185
        %v1313 = vadd.f32 %v1312, %v1186
        %v1314 = vadd.f32 %v1313, %v1187
        %v1315 = vadd.f32 %v1314, %v1188
        %v1316 = vadd.f32 %v1315, %v1189
        %v1317 = vadd.f32 %v1316, %v1190
        %v1318 = vadd.f32 %v1317, %v1191
        %v1319 = vadd.f32 %v1318, %v1192
        %v1320 = vadd.f32 %v1319, %v1193
        %v1321 = vadd.f32 %v1320, %v1194
        %v1322 = vadd.f32 %v1321, %v1195
        %v1323 = vadd.f32 %v1322, %v1196
        %v1324 = vadd.f32 %v1323, %v1197
        %v1325 = vadd.f32 %v1324, %v1198
        %v1326 = vadd.f32 %v1070, %v1325
        %1327 = vst [vmem:[%s1069] sm:$0xff] %v1326
        %s1328 = sand.u32 %s127, 1
        %s1329 = scalar_lea.sflag [#allocation4], %s1328
        %s1330 = sand.u32 %s127, 1
        %s1331 = smul.addr %s1330, 16
        %s1332 = scalar_lea.vmem [#allocation8], %s1331
        // Predicated region
        $region49: #{tpu_custom_call.1} parent=31 // pred_check
          %p1333 = pneg %p137
        $region50: #{tpu_custom_call.1} parent=31 // pred_check_branch
          %1335 = sbr.rel (%p1333) target = $region52
        $region51: #{tpu_custom_call.1} parent=31 // pred_region
          %s1337 = ssub.s32 256, 256
          %1338 = vsyncadd %s1329, %s1337
          %s1339 = smul.addr %s27, 2
          %s1340 = smul.addr %s1339, 128
          %s1341 = scalar_lea.hbm %s3, %s1340
          %s1342 = sshll.u32 %s1332, 4
          %s1343 = int_to_ptr.vmem [resolvable:$true] %s1342
          %1348 = dma.vmem_to_hbm [thread:$0]  %s1343, 256, %s1341, %s1329, 128, 128, 8
        $region52: #{tpu_custom_call.1} parent=31 // pred_fallthru
          _
      $region32: #{tpu_custom_call.1} parent=5 // pred_fallthru
        _
      %p1349 = scmp.le.s32.totalorder 2, %s18
      // Predicated region
      $region53: #{tpu_custom_call.1} parent=5 // pred_check
        %p1350 = pneg %p1349
      $region54: #{tpu_custom_call.1} parent=5 // pred_check_branch
        %1352 = sbr.rel (%p1350) target = $region56
      $region55: #{tpu_custom_call.1} parent=5 // pred_region
        %s1353 = ssub.s32 %s18, 2
        // Predicated region
        $region57: #{tpu_custom_call.1} parent=55 // pred_check
          %p1354 = pneg %p143
        $region58: #{tpu_custom_call.1} parent=55 // pred_check_branch
          %1356 = sbr.rel (%p1354) target = $region60
        $region59: #{tpu_custom_call.1} parent=55 // pred_region
          %s1357 = sand.u32 %s128, 1
          %s1358 = scalar_lea.sflag [#allocation4], %s1357
          %s1359 = sand.u32 %s128, 1
          %s1360 = smul.addr %s1359, 16
          %s1361 = scalar_lea.vmem [#allocation8], %s1360
          %1362 = dma.done %s1358, 256
        $region60: #{tpu_custom_call.1} parent=55 // pred_fallthru
          _
      $region56: #{tpu_custom_call.1} parent=5 // pred_fallthru
        _
    $region6: #{tpu_custom_call.1} parent=1 // loop_footer
      %s22 = sadd.s32 1, %s18
    $region7: #{tpu_custom_call.1} parent=1 // loop_footer_branch
      %17 = sbr.rel target = $region3
    $region8: #{tpu_custom_call.1} parent=1 // loop_exit
      _
    %1363 = vsyncpa [#allocation3], 1
    %s1364 = scalar_lea.sflag [#allocation3], 1
    %1365 = vsyncpa %s1364, 1
    %1366 = vsyncpa [#allocation6], 1
    %s1367 = scalar_lea.sflag [#allocation6], 1
    %1368 = vsyncpa %s1367, 1
    %1369 = vsyncpa [#allocation4], 1
    %s1370 = scalar_lea.sflag [#allocation4], 1
    %1371 = vsyncpa %s1370, 1

</llo_original>
